<compile_context>
chip_gen: v6e
topology: v6e:2x2x1
jax: 0.10.0
libtpu: 0.0.40
codegen_flags: <defaults>
</compile_context>

<pallas_src>
import functools

import jax
import jax.numpy as jnp
from jax.experimental import pallas as pl
from jax.experimental.pallas import tpu as pltpu


def _pad3d_kernel(x_ref, o_ref, *, pad, mode, value):
    """x_ref: (B, D, H, W) block; o_ref: (B, D+2p, H+2p, W+2p) block."""
    p = pad
    B, D, H, W = x_ref.shape

    if p == 0:
        o_ref[...] = x_ref[...]
        return

    if mode == "constant":
        # One dense full-block fill (broadcast store), then one interior slab
        # store.  The redundant VMEM stores are free: the kernel is HBM-bound.
        o_ref[...] = jnp.full(o_ref.shape, value, o_ref.dtype)
        o_ref[:, pl.ds(p, D), pl.ds(p, H), pl.ds(p, W)] = x_ref[...]
        return

    reflect = mode == "reflect"

    def _lo(arr, axis):
        """Low-side border of width p along `axis` (reflect / replicate)."""
        sl = [slice(None)] * arr.ndim
        if reflect:
            parts = []
            for i in range(p, 0, -1):              # src indices p, p-1, ..., 1
                s = list(sl)
                s[axis] = slice(i, i + 1)
                parts.append(arr[tuple(s)])
        else:                                      # replicate edge 0
            s = list(sl)
            s[axis] = slice(0, 1)
            parts = [arr[tuple(s)]] * p
        return parts[0] if p == 1 else jnp.concatenate(parts, axis=axis)

    def _hi(arr, axis):
        """High-side border of width p along `axis` (reflect / replicate)."""
        m = arr.shape[axis]
        sl = [slice(None)] * arr.ndim
        if reflect:
            parts = []
            for i in range(m - 2, m - 2 - p, -1):  # src m-2, m-3, ..., m-1-p
                s = list(sl)
                s[axis] = slice(i, i + 1)
                parts.append(arr[tuple(s)])
        else:                                      # replicate edge m-1
            s = list(sl)
            s[axis] = slice(m - 1, m)
            parts = [arr[tuple(s)]] * p
        return parts[0] if p == 1 else jnp.concatenate(parts, axis=axis)

    x = x_ref[...]                                              # (B, D, H, W)
    # Pad W (lane axis) and H (sublane axis) in registers: the lane/sublane
    # shifts run on the XLU (idle in this store-heavy kernel) and replace
    # 4p masked vst.msk stores with one wide slab store.
    xw = jnp.concatenate([_lo(x, 3), x, _hi(x, 3)], axis=3)     # (B, D, H, Wo)
    xh = jnp.concatenate([_lo(xw, 2), xw, _hi(xw, 2)], axis=2)  # (B, D, Ho, Wo)

    # Interior depths (H/W fully padded): one wide store.
    o_ref[:, pl.ds(p, D), :, :] = xh
    # D borders: one p-deep slab store per side, sourced from the in-register
    # value xh (no o_ref read-after-write dependency tail).
    o_ref[:, pl.ds(0, p), :, :] = _lo(xh, 1)
    o_ref[:, pl.ds(p + D, p), :, :] = _hi(xh, 1)


def _round_up(n, m):
    return -(-n // m) * m


def _vmem_padded_bytes(d, h, w, itemsize):
    """Real VMEM footprint of a (d, h, w) volume incl. (sublane, lane) tiling."""
    sublane = {4: 8, 2: 16, 1: 32}.get(itemsize, 8)
    return d * _round_up(max(h, 1), sublane) * _round_up(max(w, 1), 128) * itemsize


def _choose_block_batch(nc, pair_bytes, target_bytes=8 << 20,
                        min_steps=8, min_block_bytes=512 << 10):
    """Pick per-step batch B (channel-volumes per block) from padded bytes."""
    # Largest B whose padded in+out footprint fits the per-step byte budget.
    b = max(1, min(nc, target_bytes // max(pair_bytes, 1)))
    # v7x megacore: prefer >= min_steps grid steps (>= min_steps/2 per core)
    # as long as each block still carries >= min_block_bytes of padded traffic.
    want = min(min_steps, nc)
    b_for_steps = max(1, nc // want)
    if b_for_steps < b and b_for_steps * pair_bytes >= min_block_bytes:
        b = b_for_steps
    # Always keep at least 2 steps when there is more than one volume.
    if nc >= 2 and pl.cdiv(nc, b) < 2:
        b = pl.cdiv(nc, 2)
    # Prefer an even total step count (balanced split across v7x's two cores).
    steps = pl.cdiv(nc, b)
    if steps % 2 == 1 and steps < nc:
        for bb in range(b - 1, max(b // 2, 1) - 1, -1):
            if pl.cdiv(nc, bb) % 2 == 0:
                b = bb
                break
    return b


def pad3d(x, pad, mode, constant_value=0.0):
    """Pallas equivalent of Pad3d(pad, mode)(x) for x of shape (N, C, D, H, W)."""
    assert mode in ("reflect", "replicate", "constant")
    N, C, D, H, W = x.shape
    p = int(pad)
    if mode == "reflect" and p > 0:
        assert p <= D - 1 and p <= H - 1 and p <= W - 1, \
            "reflect pad requires pad <= dim-1 on every spatial axis"
    Do, Ho, Wo = D + 2 * p, H + 2 * p, W + 2 * p
    NC = N * C
    xr = x.reshape(NC, D, H, W)

    itemsize = jnp.dtype(x.dtype).itemsize
    # Per-channel-volume VMEM footprint INCLUDING (8,128)-style tile padding
    # (for W~16-20 this is ~6-8x the logical bytes and must be counted).
    in_pad = _vmem_padded_bytes(D, H, W, itemsize)
    out_pad = _vmem_padded_bytes(Do, Ho, Wo, itemsize)
    B = _choose_block_batch(NC, in_pad + out_pad)
    grid = (pl.cdiv(NC, B),)

    in_blk, out_blk = B * in_pad, B * out_pad
    # Double-buffered in+out blocks + in-register concat intermediates (~2x the
    # output block) + headroom; cap at 48 MiB so v7x's 64 MiB physical VMEM
    # keeps Mosaic internal-scratch/semaphore headroom; floor 16 MiB.
    vmem_limit = int(min(max(2 * (in_blk + out_blk) + 2 * out_blk + (4 << 20),
                             16 << 20), 48 << 20))

    kern = functools.partial(_pad3d_kernel, pad=p, mode=mode, value=constant_value)
    out = pl.pallas_call(
        kern,
        out_shape=jax.ShapeDtypeStruct((NC, Do, Ho, Wo), x.dtype),
        grid=grid,
        # Last two block dims equal the full array dims -> no (8,128) issue.
        # Batch axis may be ragged (grid uses cdiv); boundary writes are
        # clipped by the pipeline and batch items are independent.
        in_specs=[pl.BlockSpec((B, D, H, W), lambda i: (i, 0, 0, 0))],
        out_specs=pl.BlockSpec((B, Do, Ho, Wo), lambda i: (i, 0, 0, 0)),
        compiler_params=pltpu.CompilerParams(
            dimension_semantics=("parallel",),
            vmem_limit_bytes=vmem_limit,
        ),
        cost_estimate=pl.CostEstimate(
            flops=0,
            transcendentals=0,
            bytes_accessed=NC * (D * H * W + Do * Ho * Wo) * itemsize,
        ),
    )(xr)
    return out.reshape(N, C, Do, Ho, Wo)


if __name__ == "__main__":
    key = jax.random.PRNGKey(0)
    N, C, D, H, W = 2, 4, 8, 16, 16
    x = jax.random.normal(key, (N, C, D, H, W), dtype=jnp.float32)

    jnp_mode = {"reflect": "reflect", "replicate": "edge", "constant": "constant"}

    for pad in (2, 1):
        pad_width = ((0, 0), (0, 0), (pad, pad), (pad, pad), (pad, pad))
        for mode in ("reflect", "replicate", "constant"):
            out = pad3d(x, pad, mode)
            jax.block_until_ready(out)
            ref = jnp.pad(x, pad_width, mode=jnp_mode[mode])
            assert out.shape == (N, C, D + 2 * pad, H + 2 * pad, W + 2 * pad)
            assert jnp.array_equal(out, ref), f"mismatch for mode={mode}, pad={pad}"

    print("KERNEL_OK")
</pallas_src>

<mosaic_0001>
module attributes {stable_mosaic.version = 11 : i64} {
  func.func @_pad3d_kernel(%arg0: i32, %arg1: memref<4x8x16x16xf32, #tpu.memory_space<vmem>>, %arg2: memref<4x12x20x20xf32, #tpu.memory_space<vmem>>) attributes {dimension_semantics = [#tpu.dimension_semantics<parallel>], iteration_bounds = array<i64: 2>, scalar_prefetch = 0 : i64, scratch_operands = 0 : i64, tpu.core_type = #tpu.core_type<tc>, window_params = [{transform_indices = @transform_0, window_bounds = array<i64: 4, 8, 16, 16>}, {transform_indices = @transform_1, window_bounds = array<i64: 4, 12, 20, 20>}]} {
    %c0 = arith.constant 0 : index
    %c0_0 = arith.constant 0 : index
    %c0_1 = arith.constant 0 : index
    %c0_2 = arith.constant 0 : index
    %0 = vector.load %arg1[%c0, %c0_0, %c0_1, %c0_2] : memref<4x8x16x16xf32, #tpu.memory_space<vmem>>, vector<4x8x16x16xf32>
    %1 = vector.extract_strided_slice %0 {offsets = [0, 0, 0, 2], sizes = [4, 8, 16, 1], strides = [1, 1, 1, 1]} : vector<4x8x16x16xf32> to vector<4x8x16x1xf32>
    %2 = vector.extract_strided_slice %0 {offsets = [0, 0, 0, 1], sizes = [4, 8, 16, 1], strides = [1, 1, 1, 1]} : vector<4x8x16x16xf32> to vector<4x8x16x1xf32>
    %3 = tpu.concatenate %1, %2 in 3 : vector<4x8x16x1xf32>, vector<4x8x16x1xf32> -> vector<4x8x16x2xf32>
    %4 = vector.extract_strided_slice %0 {offsets = [0, 0, 0, 14], sizes = [4, 8, 16, 1], strides = [1, 1, 1, 1]} : vector<4x8x16x16xf32> to vector<4x8x16x1xf32>
    %5 = vector.extract_strided_slice %0 {offsets = [0, 0, 0, 13], sizes = [4, 8, 16, 1], strides = [1, 1, 1, 1]} : vector<4x8x16x16xf32> to vector<4x8x16x1xf32>
    %6 = tpu.concatenate %4, %5 in 3 : vector<4x8x16x1xf32>, vector<4x8x16x1xf32> -> vector<4x8x16x2xf32>
    %7 = tpu.concatenate %3, %0, %6 in 3 : vector<4x8x16x2xf32>, vector<4x8x16x16xf32>, vector<4x8x16x2xf32> -> vector<4x8x16x20xf32>
    %8 = vector.extract_strided_slice %7 {offsets = [0, 0, 2, 0], sizes = [4, 8, 1, 20], strides = [1, 1, 1, 1]} : vector<4x8x16x20xf32> to vector<4x8x1x20xf32>
    %9 = vector.extract_strided_slice %7 {offsets = [0, 0, 1, 0], sizes = [4, 8, 1, 20], strides = [1, 1, 1, 1]} : vector<4x8x16x20xf32> to vector<4x8x1x20xf32>
    %10 = tpu.concatenate %8, %9 in 2 : vector<4x8x1x20xf32>, vector<4x8x1x20xf32> -> vector<4x8x2x20xf32>
    %11 = vector.extract_strided_slice %7 {offsets = [0, 0, 14, 0], sizes = [4, 8, 1, 20], strides = [1, 1, 1, 1]} : vector<4x8x16x20xf32> to vector<4x8x1x20xf32>
    %12 = vector.extract_strided_slice %7 {offsets = [0, 0, 13, 0], sizes = [4, 8, 1, 20], strides = [1, 1, 1, 1]} : vector<4x8x16x20xf32> to vector<4x8x1x20xf32>
    %13 = tpu.concatenate %11, %12 in 2 : vector<4x8x1x20xf32>, vector<4x8x1x20xf32> -> vector<4x8x2x20xf32>
    %14 = tpu.concatenate %10, %7, %13 in 2 : vector<4x8x2x20xf32>, vector<4x8x16x20xf32>, vector<4x8x2x20xf32> -> vector<4x8x20x20xf32>
    %c0_3 = arith.constant 0 : index
    %c2 = arith.constant 2 : index
    %c0_4 = arith.constant 0 : index
    %c0_5 = arith.constant 0 : index
    %15 = vector.load %arg2[%c0_3, %c2, %c0_4, %c0_5] : memref<4x12x20x20xf32, #tpu.memory_space<vmem>>, vector<4x8x20x20xf32>
    tpu.vector_store %arg2[%c0_3, %c2, %c0_4, %c0_5], %14 {strides = array<i32>} : memref<4x12x20x20xf32, #tpu.memory_space<vmem>>, vector<4x8x20x20xf32>,
    %16 = vector.extract_strided_slice %14 {offsets = [0, 2, 0, 0], sizes = [4, 1, 20, 20], strides = [1, 1, 1, 1]} : vector<4x8x20x20xf32> to vector<4x1x20x20xf32>
    %17 = vector.extract_strided_slice %14 {offsets = [0, 1, 0, 0], sizes = [4, 1, 20, 20], strides = [1, 1, 1, 1]} : vector<4x8x20x20xf32> to vector<4x1x20x20xf32>
    %18 = tpu.concatenate %16, %17 in 1 : vector<4x1x20x20xf32>, vector<4x1x20x20xf32> -> vector<4x2x20x20xf32>
    %c0_6 = arith.constant 0 : index
    %c0_7 = arith.constant 0 : index
    %c0_8 = arith.constant 0 : index
    %c0_9 = arith.constant 0 : index
    %19 = vector.load %arg2[%c0_6, %c0_7, %c0_8, %c0_9] : memref<4x12x20x20xf32, #tpu.memory_space<vmem>>, vector<4x2x20x20xf32>
    tpu.vector_store %arg2[%c0_6, %c0_7, %c0_8, %c0_9], %18 {strides = array<i32>} : memref<4x12x20x20xf32, #tpu.memory_space<vmem>>, vector<4x2x20x20xf32>,
    %20 = vector.extract_strided_slice %14 {offsets = [0, 6, 0, 0], sizes = [4, 1, 20, 20], strides = [1, 1, 1, 1]} : vector<4x8x20x20xf32> to vector<4x1x20x20xf32>
    %21 = vector.extract_strided_slice %14 {offsets = [0, 5, 0, 0], sizes = [4, 1, 20, 20], strides = [1, 1, 1, 1]} : vector<4x8x20x20xf32> to vector<4x1x20x20xf32>
    %22 = tpu.concatenate %20, %21 in 1 : vector<4x1x20x20xf32>, vector<4x1x20x20xf32> -> vector<4x2x20x20xf32>
    %c0_10 = arith.constant 0 : index
    %c10 = arith.constant 10 : index
    %c0_11 = arith.constant 0 : index
    %c0_12 = arith.constant 0 : index
    %23 = vector.load %arg2[%c0_10, %c10, %c0_11, %c0_12] : memref<4x12x20x20xf32, #tpu.memory_space<vmem>>, vector<4x2x20x20xf32>
    tpu.vector_store %arg2[%c0_10, %c10, %c0_11, %c0_12], %22 {strides = array<i32>} : memref<4x12x20x20xf32, #tpu.memory_space<vmem>>, vector<4x2x20x20xf32>,
    return
  }
  func.func @transform_0(%arg0: i32) -> (i32, i32, i32, i32) {
    %c0_i32 = arith.constant 0 : i32
    %c0_i32_0 = arith.constant 0 : i32
    %c0_i32_1 = arith.constant 0 : i32
    %c0_i32_2 = arith.constant 0 : i32
    return %arg0, %c0_i32, %c0_i32_0, %c0_i32_1 : i32, i32, i32, i32
  }
  func.func @transform_1(%arg0: i32) -> (i32, i32, i32, i32) {
    %c0_i32 = arith.constant 0 : i32
    %c0_i32_0 = arith.constant 0 : i32
    %c0_i32_1 = arith.constant 0 : i32
    %c0_i32_2 = arith.constant 0 : i32
    return %arg0, %c0_i32, %c0_i32_0, %c0_i32_1 : i32, i32, i32, i32
  }
}

</mosaic_0001>

<llo_original>
// kernel: tpu_custom_call.1
$region0: #{tpu_custom_call.1}
  #allocation0 [shape = 'u32[]', space=smem, size = 0x4, offset = 0x4, fixed_abs, tag = 'smem constant byte address 0x4 - core index']
  #allocation1 [shape = 'u32[144,128]{1,0:T(1,128)}', space=vmem, size = 0x12000, scoped, tag = 'internal scratch']
  %s0 = inlined_call_operand.hbm [shape: f32[8,8,16,16], index: 0, kind: input, shape index: {}]
  %s1 = inlined_call_operand.vmem [shape: f32[8,12,20,20], index: 1, kind: output, shape index: {}]
  %s2 = sld [smem:[#allocation0]]
  $region41: #{tpu_custom_call.1} parent=0
    _
  %s4 = ssub.s32 1, %s2
  %s5 = scalar_select 0, %s4, %s2
  $region1: #{tpu_custom_call.1} parent=0
    #allocation2 [shape = 'u8[524288]{0}', space=vmem, size = 0x80000, scoped, tag = 'input window, operand 0']
    #allocation3 [shape = 's32[2]{0}', space=sflag, size = 0x8, scoped, tag = 'scoped memory for tpu_custom_call.1']
    %6 = vsyncpa [#allocation3], 0
    %s7 = scalar_lea.sflag [#allocation3], 1
    %8 = vsyncpa %s7, 0
    loop: start=0, step=1, limit=4
    $region2: #{tpu_custom_call.1} parent=1 // loop_pre_header
      _
    $region3: #{tpu_custom_call.1} parent=1 // loop_header
      %s10 = sphi 0, %s14
      %p11 = scmp.ge.s32.totalorder %s10, 4
      %s20 = sphi 0, %s22
      %s23 = sphi 0, %s20
      %s24 = sphi 0, %s23
      %s40 = sphi 0, %s24
      %s46 = sphi 0, %s48
      %s49 = sphi 0, %s46
      %s50 = sphi 0, %s49
      %s66 = sphi 0, %s50
    $region4: #{tpu_custom_call.1} parent=1 // loop_header_branch
      %13 = sbr.rel (%p11) target = $region8
    $region5: #{tpu_custom_call.1} parent=1 // loop_body
      %s15 = ssub.s32 %s10, 1
      %s16 = ssub.s32 %s10, 2
      %s17 = sadd.s32 %s10, 1
      %s18 = ssub.s32 %s10, %s17
      %p19 = scmp.eq.s32.totalorder %s18, 0
      %s21 = sadd.s32 %s20, 1
      %s22 = scalar_select %p19, %s20, %s21
      %p25 = pneg %p19
      %p26 = scmp.eq.s32.totalorder %s10, 1
      %p27 = por %p25, %p26
      %p28 = scmp.ne.s32.totalorder %s20, %s23
      %p29 = scmp.eq.s32.totalorder %s10, 0
      %p30 = por %p28, %p29
      %p31 = scmp.ne.s32.totalorder %s20, %s23
      %p32 = scmp.eq.s32.totalorder %s15, 1
      %p33 = por %p31, %p32
      %p34 = scmp.ne.s32.totalorder %s23, %s24
      %p35 = scmp.eq.s32.totalorder %s15, 0
      %p36 = por %p34, %p35
      %p37 = scmp.ne.s32.totalorder %s23, %s24
      %p38 = scmp.eq.s32.totalorder %s16, 1
      %p39 = por %p37, %p38
      %p41 = scmp.ne.s32.totalorder %s24, %s40
      %p42 = scmp.eq.s32.totalorder %s16, 0
      %p43 = por %p41, %p42
      %s44 = ssub.s32 %s10, %s17
      %p45 = scmp.eq.s32.totalorder %s44, 0
      %s47 = sadd.s32 %s46, 1
      %s48 = scalar_select %p45, %s46, %s47
      %p51 = pneg %p45
      %p52 = scmp.eq.s32.totalorder %s10, 1
      %p53 = por %p51, %p52
      %p54 = scmp.ne.s32.totalorder %s46, %s49
      %p55 = scmp.eq.s32.totalorder %s10, 0
      %p56 = por %p54, %p55
      %p57 = scmp.ne.s32.totalorder %s46, %s49
      %p58 = scmp.eq.s32.totalorder %s15, 1
      %p59 = por %p57, %p58
      %p60 = scmp.ne.s32.totalorder %s49, %s50
      %p61 = scmp.eq.s32.totalorder %s15, 0
      %p62 = por %p60, %p61
      %p63 = scmp.ne.s32.totalorder %s49, %s50
      %p64 = scmp.eq.s32.totalorder %s16, 1
      %p65 = por %p63, %p64
      %p67 = scmp.ne.s32.totalorder %s50, %s66
      %p68 = scmp.eq.s32.totalorder %s16, 0
      %p69 = por %p67, %p68
      %p70 = scmp.le.s32.totalorder 1, %s10
      %p71 = scmp.lt.s32.totalorder %s10, 3
      %p72 = pnand %p70, %p71
      %p73 = pneg %p72
      // Predicated region
      $region9: #{tpu_custom_call.1} parent=5 // pred_check
        _
      $region10: #{tpu_custom_call.1} parent=5 // pred_check_branch
        %75 = sbr.rel (%p72) target = $region12
      $region11: #{tpu_custom_call.1} parent=5 // pred_region
        %s76 = ssub.s32 %s10, 1
      $region12: #{tpu_custom_call.1} parent=5 // pred_fallthru
        _
      %p77 = scmp.lt.s32.totalorder %s10, 2
      // Predicated region
      $region13: #{tpu_custom_call.1} parent=5 // pred_check
        %p78 = pneg %p77
      $region14: #{tpu_custom_call.1} parent=5 // pred_check_branch
        %80 = sbr.rel (%p78) target = $region16
      $region15: #{tpu_custom_call.1} parent=5 // pred_region
        // Predicated region
        $region17: #{tpu_custom_call.1} parent=15 // pred_check
          %p81 = pneg %p30
        $region18: #{tpu_custom_call.1} parent=15 // pred_check_branch
          %83 = sbr.rel (%p81) target = $region20
        $region19: #{tpu_custom_call.1} parent=15 // pred_region
          %s84 = sand.u32 %s20, 1
          %s85 = scalar_lea.sflag [#allocation3], %s84
          %s86 = sand.u32 %s20, 1
          %s87 = smul.addr %s86, 512
          %s88 = scalar_lea.vmem [#allocation2], %s87
          %s89 = smul.u32 4, %s10
          %s91 = ssub.s32 8192, 8192
          %92 = vsyncadd %s85, %s91
          %s93 = smul.addr %s89, 16
          %s94 = smul.addr %s93, 128
          %s95 = scalar_lea.hbm %s0, %s94
          %s96 = sshll.u32 %s88, 4
          %s97 = int_to_ptr.vmem [resolvable:$true] %s96
          %102 = dma.hbm_to_vmem [thread:$0]  %s95, 8192, %s97, %s85, 128, 128, 8
        $region20: #{tpu_custom_call.1} parent=15 // pred_fallthru
          _
      $region16: #{tpu_custom_call.1} parent=5 // pred_fallthru
        _
      %p103 = scmp.le.s32.totalorder 1, %s10
      %p104 = scmp.lt.s32.totalorder %s10, 3
      %p105 = pnand %p103, %p104
      %p106 = pneg %p105
      // Predicated region
      $region21: #{tpu_custom_call.1} parent=5 // pred_check
        _
      $region22: #{tpu_custom_call.1} parent=5 // pred_check_branch
        %108 = sbr.rel (%p105) target = $region24
      $region23: #{tpu_custom_call.1} parent=5 // pred_region
        %s109 = ssub.s32 %s10, 1
        %s110 = sand.u32 %s23, 1
        %s111 = scalar_lea.sflag [#allocation3], %s110
        %s112 = sand.u32 %s23, 1
        %s113 = smul.addr %s112, 512
        %s114 = scalar_lea.vmem [#allocation2], %s113
        // Predicated region
        $region25: #{tpu_custom_call.1} parent=23 // pred_check
          %p115 = pneg %p36
        $region26: #{tpu_custom_call.1} parent=23 // pred_check_branch
          %117 = sbr.rel (%p115) target = $region28
        $region27: #{tpu_custom_call.1} parent=23 // pred_region
          %118 = dma.done %s111, 8192
        $region28: #{tpu_custom_call.1} parent=23 // pred_fallthru
          _
        %s119 = sand.u32 %s23, 1
        %s120 = scalar_lea.sflag [#allocation3], %s119
        %s121 = sand.u32 %s23, 1
        %s122 = smul.addr %s121, 512
        %s123 = scalar_lea.vmem [#allocation2], %s122
        %p124 = pneg %p36
        %p125 = pneg %p33
        %p126 = pneg %p62
        %p127 = pneg %p59
        %s128 = smul.u32 4, %s15
        %p129 = scmp.lt.s32.totalorder %s128, 7
        %s130 = scalar_select %p129, %s128, 7
        %s131 = smul.addr %s130, 36
        %s132 = smul.addr %s131, 8
        %s133 = scalar_lea.vmem %s1, %s132
        %s134 = smul.u32 4, %s15
        %s135 = smul.u32 4, %s15
        %p136 = scmp.lt.s32.totalorder %s135, 7
        %s137 = scalar_select %p136, %s135, 7
        %s138 = smul.addr %s137, 36
        %s139 = smul.addr %s138, 8
        %s140 = scalar_lea.vmem %s1, %s139
        %s141 = smul.u32 4, %s15
        %v142 = vld [vmem:[%s114] sm:$0xff]
        %v143 = vld [vmem:[%s114 + $0x8] sm:$0xff]
        %v144 = vld [vmem:[%s114 + $0x10] sm:$0xff]
        %v145 = vld [vmem:[%s114 + $0x18] sm:$0xff]
        %v146 = vld [vmem:[%s114 + $0x20] sm:$0xff]
        %v147 = vld [vmem:[%s114 + $0x28] sm:$0xff]
        %v148 = vld [vmem:[%s114 + $0x30] sm:$0xff]
        %v149 = vld [vmem:[%s114 + $0x38] sm:$0xff]
        %v150 = vld [vmem:[%s114 + $0x40] sm:$0xff]
        %v151 = vld [vmem:[%s114 + $0x48] sm:$0xff]
        %v152 = vld [vmem:[%s114 + $0x50] sm:$0xff]
        %v153 = vld [vmem:[%s114 + $0x58] sm:$0xff]
        %v154 = vld [vmem:[%s114 + $0x60] sm:$0xff]
        %v155 = vld [vmem:[%s114 + $0x68] sm:$0xff]
        %v156 = vld [vmem:[%s114 + $0x70] sm:$0xff]
        %v157 = vld [vmem:[%s114 + $0x78] sm:$0xff]
        %v158 = vld [vmem:[%s114 + $0x80] sm:$0xff]
        %v159 = vld [vmem:[%s114 + $0x88] sm:$0xff]
        %v160 = vld [vmem:[%s114 + $0x90] sm:$0xff]
        %v161 = vld [vmem:[%s114 + $0x98] sm:$0xff]
        %v162 = vld [vmem:[%s114 + $0xa0] sm:$0xff]
        %v163 = vld [vmem:[%s114 + $0xa8] sm:$0xff]
        %v164 = vld [vmem:[%s114 + $0xb0] sm:$0xff]
        %v165 = vld [vmem:[%s114 + $0xb8] sm:$0xff]
        %v166 = vld [vmem:[%s114 + $0xc0] sm:$0xff]
        %v167 = vld [vmem:[%s114 + $0xc8] sm:$0xff]
        %v168 = vld [vmem:[%s114 + $0xd0] sm:$0xff]
        %v169 = vld [vmem:[%s114 + $0xd8] sm:$0xff]
        %v170 = vld [vmem:[%s114 + $0xe0] sm:$0xff]
        %v171 = vld [vmem:[%s114 + $0xe8] sm:$0xff]
        %v172 = vld [vmem:[%s114 + $0xf0] sm:$0xff]
        %v173 = vld [vmem:[%s114 + $0xf8] sm:$0xff]
        %v174 = vld [vmem:[%s114 + $0x100] sm:$0xff]
        %v175 = vld [vmem:[%s114 + $0x108] sm:$0xff]
        %v176 = vld [vmem:[%s114 + $0x110] sm:$0xff]
        %v177 = vld [vmem:[%s114 + $0x118] sm:$0xff]
        %v178 = vld [vmem:[%s114 + $0x120] sm:$0xff]
        %v179 = vld [vmem:[%s114 + $0x128] sm:$0xff]
        %v180 = vld [vmem:[%s114 + $0x130] sm:$0xff]
        %v181 = vld [vmem:[%s114 + $0x138] sm:$0xff]
        %v182 = vld [vmem:[%s114 + $0x140] sm:$0xff]
        %v183 = vld [vmem:[%s114 + $0x148] sm:$0xff]
        %v184 = vld [vmem:[%s114 + $0x150] sm:$0xff]
        %v185 = vld [vmem:[%s114 + $0x158] sm:$0xff]
        %v186 = vld [vmem:[%s114 + $0x160] sm:$0xff]
        %v187 = vld [vmem:[%s114 + $0x168] sm:$0xff]
        %v188 = vld [vmem:[%s114 + $0x170] sm:$0xff]
        %v189 = vld [vmem:[%s114 + $0x178] sm:$0xff]
        %v190 = vld [vmem:[%s114 + $0x180] sm:$0xff]
        %v191 = vld [vmem:[%s114 + $0x188] sm:$0xff]
        %v192 = vld [vmem:[%s114 + $0x190] sm:$0xff]
        %v193 = vld [vmem:[%s114 + $0x198] sm:$0xff]
        %v194 = vld [vmem:[%s114 + $0x1a0] sm:$0xff]
        %v195 = vld [vmem:[%s114 + $0x1a8] sm:$0xff]
        %v196 = vld [vmem:[%s114 + $0x1b0] sm:$0xff]
        %v197 = vld [vmem:[%s114 + $0x1b8] sm:$0xff]
        %v198 = vld [vmem:[%s114 + $0x1c0] sm:$0xff]
        %v199 = vld [vmem:[%s114 + $0x1c8] sm:$0xff]
        %v200 = vld [vmem:[%s114 + $0x1d0] sm:$0xff]
        %v201 = vld [vmem:[%s114 + $0x1d8] sm:$0xff]
        %v202 = vld [vmem:[%s114 + $0x1e0] sm:$0xff]
        %v203 = vld [vmem:[%s114 + $0x1e8] sm:$0xff]
        %v204 = vld [vmem:[%s114 + $0x1f0] sm:$0xff]
        %v205 = vld [vmem:[%s114 + $0x1f8] sm:$0xff]
        %270 = vrot.lane.b32.xlu0 %v142, 126
        %v271 = vpop.permute.xlu0 %270
        %272 = vrot.lane.b32.xlu0 %v143, 126
        %v273 = vpop.permute.xlu0 %272
        %274 = vrot.lane.b32.xlu0 %v144, 126
        %v275 = vpop.permute.xlu0 %274
        %276 = vrot.lane.b32.xlu0 %v145, 126
        %v277 = vpop.permute.xlu0 %276
        %278 = vrot.lane.b32.xlu0 %v146, 126
        %v279 = vpop.permute.xlu0 %278
        %280 = vrot.lane.b32.xlu0 %v147, 126
        %v281 = vpop.permute.xlu0 %280
        %282 = vrot.lane.b32.xlu0 %v148, 126
        %v283 = vpop.permute.xlu0 %282
        %284 = vrot.lane.b32.xlu0 %v149, 126
        %v285 = vpop.permute.xlu0 %284
        %286 = vrot.lane.b32.xlu0 %v150, 126
        %v287 = vpop.permute.xlu0 %286
        %288 = vrot.lane.b32.xlu0 %v151, 126
        %v289 = vpop.permute.xlu0 %288
        %290 = vrot.lane.b32.xlu0 %v152, 126
        %v291 = vpop.permute.xlu0 %290
        %292 = vrot.lane.b32.xlu0 %v153, 126
        %v293 = vpop.permute.xlu0 %292
        %294 = vrot.lane.b32.xlu0 %v154, 126
        %v295 = vpop.permute.xlu0 %294
        %296 = vrot.lane.b32.xlu0 %v155, 126
        %v297 = vpop.permute.xlu0 %296
        %298 = vrot.lane.b32.xlu0 %v156, 126
        %v299 = vpop.permute.xlu0 %298
        %300 = vrot.lane.b32.xlu0 %v157, 126
        %v301 = vpop.permute.xlu0 %300
        %302 = vrot.lane.b32.xlu0 %v158, 126
        %v303 = vpop.permute.xlu0 %302
        %304 = vrot.lane.b32.xlu0 %v159, 126
        %v305 = vpop.permute.xlu0 %304
        %306 = vrot.lane.b32.xlu0 %v160, 126
        %v307 = vpop.permute.xlu0 %306
        %308 = vrot.lane.b32.xlu0 %v161, 126
        %v309 = vpop.permute.xlu0 %308
        %310 = vrot.lane.b32.xlu0 %v162, 126
        %v311 = vpop.permute.xlu0 %310
        %312 = vrot.lane.b32.xlu0 %v163, 126
        %v313 = vpop.permute.xlu0 %312
        %314 = vrot.lane.b32.xlu0 %v164, 126
        %v315 = vpop.permute.xlu0 %314
        %316 = vrot.lane.b32.xlu0 %v165, 126
        %v317 = vpop.permute.xlu0 %316
        %318 = vrot.lane.b32.xlu0 %v166, 126
        %v319 = vpop.permute.xlu0 %318
        %320 = vrot.lane.b32.xlu0 %v167, 126
        %v321 = vpop.permute.xlu0 %320
        %322 = vrot.lane.b32.xlu0 %v168, 126
        %v323 = vpop.permute.xlu0 %322
        %324 = vrot.lane.b32.xlu0 %v169, 126
        %v325 = vpop.permute.xlu0 %324
        %326 = vrot.lane.b32.xlu0 %v170, 126
        %v327 = vpop.permute.xlu0 %326
        %328 = vrot.lane.b32.xlu0 %v171, 126
        %v329 = vpop.permute.xlu0 %328
        %330 = vrot.lane.b32.xlu0 %v172, 126
        %v331 = vpop.permute.xlu0 %330
        %332 = vrot.lane.b32.xlu0 %v173, 126
        %v333 = vpop.permute.xlu0 %332
        %334 = vrot.lane.b32.xlu0 %v174, 126
        %v335 = vpop.permute.xlu0 %334
        %336 = vrot.lane.b32.xlu0 %v175, 126
        %v337 = vpop.permute.xlu0 %336
        %338 = vrot.lane.b32.xlu0 %v176, 126
        %v339 = vpop.permute.xlu0 %338
        %340 = vrot.lane.b32.xlu0 %v177, 126
        %v341 = vpop.permute.xlu0 %340
        %342 = vrot.lane.b32.xlu0 %v178, 126
        %v343 = vpop.permute.xlu0 %342
        %344 = vrot.lane.b32.xlu0 %v179, 126
        %v345 = vpop.permute.xlu0 %344
        %346 = vrot.lane.b32.xlu0 %v180, 126
        %v347 = vpop.permute.xlu0 %346
        %348 = vrot.lane.b32.xlu0 %v181, 126
        %v349 = vpop.permute.xlu0 %348
        %350 = vrot.lane.b32.xlu0 %v182, 126
        %v351 = vpop.permute.xlu0 %350
        %352 = vrot.lane.b32.xlu0 %v183, 126
        %v353 = vpop.permute.xlu0 %352
        %354 = vrot.lane.b32.xlu0 %v184, 126
        %v355 = vpop.permute.xlu0 %354
        %356 = vrot.lane.b32.xlu0 %v185, 126
        %v357 = vpop.permute.xlu0 %356
        %358 = vrot.lane.b32.xlu0 %v186, 126
        %v359 = vpop.permute.xlu0 %358
        %360 = vrot.lane.b32.xlu0 %v187, 126
        %v361 = vpop.permute.xlu0 %360
        %362 = vrot.lane.b32.xlu0 %v188, 126
        %v363 = vpop.permute.xlu0 %362
        %364 = vrot.lane.b32.xlu0 %v189, 126
        %v365 = vpop.permute.xlu0 %364
        %366 = vrot.lane.b32.xlu0 %v190, 126
        %v367 = vpop.permute.xlu0 %366
        %368 = vrot.lane.b32.xlu0 %v191, 126
        %v369 = vpop.permute.xlu0 %368
        %370 = vrot.lane.b32.xlu0 %v192, 126
        %v371 = vpop.permute.xlu0 %370
        %372 = vrot.lane.b32.xlu0 %v193, 126
        %v373 = vpop.permute.xlu0 %372
        %374 = vrot.lane.b32.xlu0 %v194, 126
        %v375 = vpop.permute.xlu0 %374
        %376 = vrot.lane.b32.xlu0 %v195, 126
        %v377 = vpop.permute.xlu0 %376
        %378 = vrot.lane.b32.xlu0 %v196, 126
        %v379 = vpop.permute.xlu0 %378
        %380 = vrot.lane.b32.xlu0 %v197, 126
        %v381 = vpop.permute.xlu0 %380
        %382 = vrot.lane.b32.xlu0 %v198, 126
        %v383 = vpop.permute.xlu0 %382
        %384 = vrot.lane.b32.xlu0 %v199, 126
        %v385 = vpop.permute.xlu0 %384
        %386 = vrot.lane.b32.xlu0 %v200, 126
        %v387 = vpop.permute.xlu0 %386
        %388 = vrot.lane.b32.xlu0 %v201, 126
        %v389 = vpop.permute.xlu0 %388
        %390 = vrot.lane.b32.xlu0 %v202, 126
        %v391 = vpop.permute.xlu0 %390
        %392 = vrot.lane.b32.xlu0 %v203, 126
        %v393 = vpop.permute.xlu0 %392
        %394 = vrot.lane.b32.xlu0 %v204, 126
        %v395 = vpop.permute.xlu0 %394
        %396 = vrot.lane.b32.xlu0 %v205, 126
        %v397 = vpop.permute.xlu0 %396
        %vm462 = vcmask 7168
        %v463 = vsel %vm462, %v271, %v142
        %v464 = vsel %vm462, %v273, %v143
        %v465 = vsel %vm462, %v275, %v144
        %v466 = vsel %vm462, %v277, %v145
        %v467 = vsel %vm462, %v279, %v146
        %v468 = vsel %vm462, %v281, %v147
        %v469 = vsel %vm462, %v283, %v148
        %v470 = vsel %vm462, %v285, %v149
        %v471 = vsel %vm462, %v287, %v150
        %v472 = vsel %vm462, %v289, %v151
        %v473 = vsel %vm462, %v291, %v152
        %v474 = vsel %vm462, %v293, %v153
        %v475 = vsel %vm462, %v295, %v154
        %v476 = vsel %vm462, %v297, %v155
        %v477 = vsel %vm462, %v299, %v156
        %v478 = vsel %vm462, %v301, %v157
        %v479 = vsel %vm462, %v303, %v158
        %v480 = vsel %vm462, %v305, %v159
        %v481 = vsel %vm462, %v307, %v160
        %v482 = vsel %vm462, %v309, %v161
        %v483 = vsel %vm462, %v311, %v162
        %v484 = vsel %vm462, %v313, %v163
        %v485 = vsel %vm462, %v315, %v164
        %v486 = vsel %vm462, %v317, %v165
        %v487 = vsel %vm462, %v319, %v166
        %v488 = vsel %vm462, %v321, %v167
        %v489 = vsel %vm462, %v323, %v168
        %v490 = vsel %vm462, %v325, %v169
        %v491 = vsel %vm462, %v327, %v170
        %v492 = vsel %vm462, %v329, %v171
        %v493 = vsel %vm462, %v331, %v172
        %v494 = vsel %vm462, %v333, %v173
        %v495 = vsel %vm462, %v335, %v174
        %v496 = vsel %vm462, %v337, %v175
        %v497 = vsel %vm462, %v339, %v176
        %v498 = vsel %vm462, %v341, %v177
        %v499 = vsel %vm462, %v343, %v178
        %v500 = vsel %vm462, %v345, %v179
        %v501 = vsel %vm462, %v347, %v180
        %v502 = vsel %vm462, %v349, %v181
        %v503 = vsel %vm462, %v351, %v182
        %v504 = vsel %vm462, %v353, %v183
        %v505 = vsel %vm462, %v355, %v184
        %v506 = vsel %vm462, %v357, %v185
        %v507 = vsel %vm462, %v359, %v186
        %v508 = vsel %vm462, %v361, %v187
        %v509 = vsel %vm462, %v363, %v188
        %v510 = vsel %vm462, %v365, %v189
        %v511 = vsel %vm462, %v367, %v190
        %v512 = vsel %vm462, %v369, %v191
        %v513 = vsel %vm462, %v371, %v192
        %v514 = vsel %vm462, %v373, %v193
        %v515 = vsel %vm462, %v375, %v194
        %v516 = vsel %vm462, %v377, %v195
        %v517 = vsel %vm462, %v379, %v196
        %v518 = vsel %vm462, %v381, %v197
        %v519 = vsel %vm462, %v383, %v198
        %v520 = vsel %vm462, %v385, %v199
        %v521 = vsel %vm462, %v387, %v200
        %v522 = vsel %vm462, %v389, %v201
        %v523 = vsel %vm462, %v391, %v202
        %v524 = vsel %vm462, %v393, %v203
        %v525 = vsel %vm462, %v395, %v204
        %v526 = vsel %vm462, %v397, %v205
        %527 = vrot.lane.b32.xlu0 %v142, 114
        %v528 = vpop.permute.xlu0 %527
        %529 = vrot.lane.b32.xlu0 %v143, 114
        %v530 = vpop.permute.xlu0 %529
        %531 = vrot.lane.b32.xlu0 %v144, 114
        %v532 = vpop.permute.xlu0 %531
        %533 = vrot.lane.b32.xlu0 %v145, 114
        %v534 = vpop.permute.xlu0 %533
        %535 = vrot.lane.b32.xlu0 %v146, 114
        %v536 = vpop.permute.xlu0 %535
        %537 = vrot.lane.b32.xlu0 %v147, 114
        %v538 = vpop.permute.xlu0 %537
        %539 = vrot.lane.b32.xlu0 %v148, 114
        %v540 = vpop.permute.xlu0 %539
        %541 = vrot.lane.b32.xlu0 %v149, 114
        %v542 = vpop.permute.xlu0 %541
        %543 = vrot.lane.b32.xlu0 %v150, 114
        %v544 = vpop.permute.xlu0 %543
        %545 = vrot.lane.b32.xlu0 %v151, 114
        %v546 = vpop.permute.xlu0 %545
        %547 = vrot.lane.b32.xlu0 %v152, 114
        %v548 = vpop.permute.xlu0 %547
        %549 = vrot.lane.b32.xlu0 %v153, 114
        %v550 = vpop.permute.xlu0 %549
        %551 = vrot.lane.b32.xlu0 %v154, 114
        %v552 = vpop.permute.xlu0 %551
        %553 = vrot.lane.b32.xlu0 %v155, 114
        %v554 = vpop.permute.xlu0 %553
        %555 = vrot.lane.b32.xlu0 %v156, 114
        %v556 = vpop.permute.xlu0 %555
        %557 = vrot.lane.b32.xlu0 %v157, 114
        %v558 = vpop.permute.xlu0 %557
        %559 = vrot.lane.b32.xlu0 %v158, 114
        %v560 = vpop.permute.xlu0 %559
        %561 = vrot.lane.b32.xlu0 %v159, 114
        %v562 = vpop.permute.xlu0 %561
        %563 = vrot.lane.b32.xlu0 %v160, 114
        %v564 = vpop.permute.xlu0 %563
        %565 = vrot.lane.b32.xlu0 %v161, 114
        %v566 = vpop.permute.xlu0 %565
        %567 = vrot.lane.b32.xlu0 %v162, 114
        %v568 = vpop.permute.xlu0 %567
        %569 = vrot.lane.b32.xlu0 %v163, 114
        %v570 = vpop.permute.xlu0 %569
        %571 = vrot.lane.b32.xlu0 %v164, 114
        %v572 = vpop.permute.xlu0 %571
        %573 = vrot.lane.b32.xlu0 %v165, 114
        %v574 = vpop.permute.xlu0 %573
        %575 = vrot.lane.b32.xlu0 %v166, 114
        %v576 = vpop.permute.xlu0 %575
        %577 = vrot.lane.b32.xlu0 %v167, 114
        %v578 = vpop.permute.xlu0 %577
        %579 = vrot.lane.b32.xlu0 %v168, 114
        %v580 = vpop.permute.xlu0 %579
        %581 = vrot.lane.b32.xlu0 %v169, 114
        %v582 = vpop.permute.xlu0 %581
        %583 = vrot.lane.b32.xlu0 %v170, 114
        %v584 = vpop.permute.xlu0 %583
        %585 = vrot.lane.b32.xlu0 %v171, 114
        %v586 = vpop.permute.xlu0 %585
        %587 = vrot.lane.b32.xlu0 %v172, 114
        %v588 = vpop.permute.xlu0 %587
        %589 = vrot.lane.b32.xlu0 %v173, 114
        %v590 = vpop.permute.xlu0 %589
        %591 = vrot.lane.b32.xlu0 %v174, 114
        %v592 = vpop.permute.xlu0 %591
        %593 = vrot.lane.b32.xlu0 %v175, 114
        %v594 = vpop.permute.xlu0 %593
        %595 = vrot.lane.b32.xlu0 %v176, 114
        %v596 = vpop.permute.xlu0 %595
        %597 = vrot.lane.b32.xlu0 %v177, 114
        %v598 = vpop.permute.xlu0 %597
        %599 = vrot.lane.b32.xlu0 %v178, 114
        %v600 = vpop.permute.xlu0 %599
        %601 = vrot.lane.b32.xlu0 %v179, 114
        %v602 = vpop.permute.xlu0 %601
        %603 = vrot.lane.b32.xlu0 %v180, 114
        %v604 = vpop.permute.xlu0 %603
        %605 = vrot.lane.b32.xlu0 %v181, 114
        %v606 = vpop.permute.xlu0 %605
        %607 = vrot.lane.b32.xlu0 %v182, 114
        %v608 = vpop.permute.xlu0 %607
        %609 = vrot.lane.b32.xlu0 %v183, 114
        %v610 = vpop.permute.xlu0 %609
        %611 = vrot.lane.b32.xlu0 %v184, 114
        %v612 = vpop.permute.xlu0 %611
        %613 = vrot.lane.b32.xlu0 %v185, 114
        %v614 = vpop.permute.xlu0 %613
        %615 = vrot.lane.b32.xlu0 %v186, 114
        %v616 = vpop.permute.xlu0 %615
        %617 = vrot.lane.b32.xlu0 %v187, 114
        %v618 = vpop.permute.xlu0 %617
        %619 = vrot.lane.b32.xlu0 %v188, 114
        %v620 = vpop.permute.xlu0 %619
        %621 = vrot.lane.b32.xlu0 %v189, 114
        %v622 = vpop.permute.xlu0 %621
        %623 = vrot.lane.b32.xlu0 %v190, 114
        %v624 = vpop.permute.xlu0 %623
        %625 = vrot.lane.b32.xlu0 %v191, 114
        %v626 = vpop.permute.xlu0 %625
        %627 = vrot.lane.b32.xlu0 %v192, 114
        %v628 = vpop.permute.xlu0 %627
        %629 = vrot.lane.b32.xlu0 %v193, 114
        %v630 = vpop.permute.xlu0 %629
        %631 = vrot.lane.b32.xlu0 %v194, 114
        %v632 = vpop.permute.xlu0 %631
        %633 = vrot.lane.b32.xlu0 %v195, 114
        %v634 = vpop.permute.xlu0 %633
        %635 = vrot.lane.b32.xlu0 %v196, 114
        %v636 = vpop.permute.xlu0 %635
        %637 = vrot.lane.b32.xlu0 %v197, 114
        %v638 = vpop.permute.xlu0 %637
        %639 = vrot.lane.b32.xlu0 %v198, 114
        %v640 = vpop.permute.xlu0 %639
        %641 = vrot.lane.b32.xlu0 %v199, 114
        %v642 = vpop.permute.xlu0 %641
        %643 = vrot.lane.b32.xlu0 %v200, 114
        %v644 = vpop.permute.xlu0 %643
        %645 = vrot.lane.b32.xlu0 %v201, 114
        %v646 = vpop.permute.xlu0 %645
        %647 = vrot.lane.b32.xlu0 %v202, 114
        %v648 = vpop.permute.xlu0 %647
        %649 = vrot.lane.b32.xlu0 %v203, 114
        %v650 = vpop.permute.xlu0 %649
        %651 = vrot.lane.b32.xlu0 %v204, 114
        %v652 = vpop.permute.xlu0 %651
        %653 = vrot.lane.b32.xlu0 %v205, 114
        %v654 = vpop.permute.xlu0 %653
        %719 = vrot.lane.b32.xlu0 %v142, 116
        %v720 = vpop.permute.xlu0 %719
        %721 = vrot.lane.b32.xlu0 %v143, 116
        %v722 = vpop.permute.xlu0 %721
        %723 = vrot.lane.b32.xlu0 %v144, 116
        %v724 = vpop.permute.xlu0 %723
        %725 = vrot.lane.b32.xlu0 %v145, 116
        %v726 = vpop.permute.xlu0 %725
        %727 = vrot.lane.b32.xlu0 %v146, 116
        %v728 = vpop.permute.xlu0 %727
        %729 = vrot.lane.b32.xlu0 %v147, 116
        %v730 = vpop.permute.xlu0 %729
        %731 = vrot.lane.b32.xlu0 %v148, 116
        %v732 = vpop.permute.xlu0 %731
        %733 = vrot.lane.b32.xlu0 %v149, 116
        %v734 = vpop.permute.xlu0 %733
        %735 = vrot.lane.b32.xlu0 %v150, 116
        %v736 = vpop.permute.xlu0 %735
        %737 = vrot.lane.b32.xlu0 %v151, 116
        %v738 = vpop.permute.xlu0 %737
        %739 = vrot.lane.b32.xlu0 %v152, 116
        %v740 = vpop.permute.xlu0 %739
        %741 = vrot.lane.b32.xlu0 %v153, 116
        %v742 = vpop.permute.xlu0 %741
        %743 = vrot.lane.b32.xlu0 %v154, 116
        %v744 = vpop.permute.xlu0 %743
        %745 = vrot.lane.b32.xlu0 %v155, 116
        %v746 = vpop.permute.xlu0 %745
        %747 = vrot.lane.b32.xlu0 %v156, 116
        %v748 = vpop.permute.xlu0 %747
        %749 = vrot.lane.b32.xlu0 %v157, 116
        %v750 = vpop.permute.xlu0 %749
        %751 = vrot.lane.b32.xlu0 %v158, 116
        %v752 = vpop.permute.xlu0 %751
        %753 = vrot.lane.b32.xlu0 %v159, 116
        %v754 = vpop.permute.xlu0 %753
        %755 = vrot.lane.b32.xlu0 %v160, 116
        %v756 = vpop.permute.xlu0 %755
        %757 = vrot.lane.b32.xlu0 %v161, 116
        %v758 = vpop.permute.xlu0 %757
        %759 = vrot.lane.b32.xlu0 %v162, 116
        %v760 = vpop.permute.xlu0 %759
        %761 = vrot.lane.b32.xlu0 %v163, 116
        %v762 = vpop.permute.xlu0 %761
        %763 = vrot.lane.b32.xlu0 %v164, 116
        %v764 = vpop.permute.xlu0 %763
        %765 = vrot.lane.b32.xlu0 %v165, 116
        %v766 = vpop.permute.xlu0 %765
        %767 = vrot.lane.b32.xlu0 %v166, 116
        %v768 = vpop.permute.xlu0 %767
        %769 = vrot.lane.b32.xlu0 %v167, 116
        %v770 = vpop.permute.xlu0 %769
        %771 = vrot.lane.b32.xlu0 %v168, 116
        %v772 = vpop.permute.xlu0 %771
        %773 = vrot.lane.b32.xlu0 %v169, 116
        %v774 = vpop.permute.xlu0 %773
        %775 = vrot.lane.b32.xlu0 %v170, 116
        %v776 = vpop.permute.xlu0 %775
        %777 = vrot.lane.b32.xlu0 %v171, 116
        %v778 = vpop.permute.xlu0 %777
        %779 = vrot.lane.b32.xlu0 %v172, 116
        %v780 = vpop.permute.xlu0 %779
        %781 = vrot.lane.b32.xlu0 %v173, 116
        %v782 = vpop.permute.xlu0 %781
        %783 = vrot.lane.b32.xlu0 %v174, 116
        %v784 = vpop.permute.xlu0 %783
        %785 = vrot.lane.b32.xlu0 %v175, 116
        %v786 = vpop.permute.xlu0 %785
        %787 = vrot.lane.b32.xlu0 %v176, 116
        %v788 = vpop.permute.xlu0 %787
        %789 = vrot.lane.b32.xlu0 %v177, 116
        %v790 = vpop.permute.xlu0 %789
        %791 = vrot.lane.b32.xlu0 %v178, 116
        %v792 = vpop.permute.xlu0 %791
        %793 = vrot.lane.b32.xlu0 %v179, 116
        %v794 = vpop.permute.xlu0 %793
        %795 = vrot.lane.b32.xlu0 %v180, 116
        %v796 = vpop.permute.xlu0 %795
        %797 = vrot.lane.b32.xlu0 %v181, 116
        %v798 = vpop.permute.xlu0 %797
        %799 = vrot.lane.b32.xlu0 %v182, 116
        %v800 = vpop.permute.xlu0 %799
        %801 = vrot.lane.b32.xlu0 %v183, 116
        %v802 = vpop.permute.xlu0 %801
        %803 = vrot.lane.b32.xlu0 %v184, 116
        %v804 = vpop.permute.xlu0 %803
        %805 = vrot.lane.b32.xlu0 %v185, 116
        %v806 = vpop.permute.xlu0 %805
        %807 = vrot.lane.b32.xlu0 %v186, 116
        %v808 = vpop.permute.xlu0 %807
        %809 = vrot.lane.b32.xlu0 %v187, 116
        %v810 = vpop.permute.xlu0 %809
        %811 = vrot.lane.b32.xlu0 %v188, 116
        %v812 = vpop.permute.xlu0 %811
        %813 = vrot.lane.b32.xlu0 %v189, 116
        %v814 = vpop.permute.xlu0 %813
        %815 = vrot.lane.b32.xlu0 %v190, 116
        %v816 = vpop.permute.xlu0 %815
        %817 = vrot.lane.b32.xlu0 %v191, 116
        %v818 = vpop.permute.xlu0 %817
        %819 = vrot.lane.b32.xlu0 %v192, 116
        %v820 = vpop.permute.xlu0 %819
        %821 = vrot.lane.b32.xlu0 %v193, 116
        %v822 = vpop.permute.xlu0 %821
        %823 = vrot.lane.b32.xlu0 %v194, 116
        %v824 = vpop.permute.xlu0 %823
        %825 = vrot.lane.b32.xlu0 %v195, 116
        %v826 = vpop.permute.xlu0 %825
        %827 = vrot.lane.b32.xlu0 %v196, 116
        %v828 = vpop.permute.xlu0 %827
        %829 = vrot.lane.b32.xlu0 %v197, 116
        %v830 = vpop.permute.xlu0 %829
        %831 = vrot.lane.b32.xlu0 %v198, 116
        %v832 = vpop.permute.xlu0 %831
        %833 = vrot.lane.b32.xlu0 %v199, 116
        %v834 = vpop.permute.xlu0 %833
        %835 = vrot.lane.b32.xlu0 %v200, 116
        %v836 = vpop.permute.xlu0 %835
        %837 = vrot.lane.b32.xlu0 %v201, 116
        %v838 = vpop.permute.xlu0 %837
        %839 = vrot.lane.b32.xlu0 %v202, 116
        %v840 = vpop.permute.xlu0 %839
        %841 = vrot.lane.b32.xlu0 %v203, 116
        %v842 = vpop.permute.xlu0 %841
        %843 = vrot.lane.b32.xlu0 %v204, 116
        %v844 = vpop.permute.xlu0 %843
        %845 = vrot.lane.b32.xlu0 %v205, 116
        %v846 = vpop.permute.xlu0 %845
        %v911 = vsel %vm462, %v528, %v720
        %v912 = vsel %vm462, %v530, %v722
        %v913 = vsel %vm462, %v532, %v724
        %v914 = vsel %vm462, %v534, %v726
        %v915 = vsel %vm462, %v536, %v728
        %v916 = vsel %vm462, %v538, %v730
        %v917 = vsel %vm462, %v540, %v732
        %v918 = vsel %vm462, %v542, %v734
        %v919 = vsel %vm462, %v544, %v736
        %v920 = vsel %vm462, %v546, %v738
        %v921 = vsel %vm462, %v548, %v740
        %v922 = vsel %vm462, %v550, %v742
        %v923 = vsel %vm462, %v552, %v744
        %v924 = vsel %vm462, %v554, %v746
        %v925 = vsel %vm462, %v556, %v748
        %v926 = vsel %vm462, %v558, %v750
        %v927 = vsel %vm462, %v560, %v752
        %v928 = vsel %vm462, %v562, %v754
        %v929 = vsel %vm462, %v564, %v756
        %v930 = vsel %vm462, %v566, %v758
        %v931 = vsel %vm462, %v568, %v760
        %v932 = vsel %vm462, %v570, %v762
        %v933 = vsel %vm462, %v572, %v764
        %v934 = vsel %vm462, %v574, %v766
        %v935 = vsel %vm462, %v576, %v768
        %v936 = vsel %vm462, %v578, %v770
        %v937 = vsel %vm462, %v580, %v772
        %v938 = vsel %vm462, %v582, %v774
        %v939 = vsel %vm462, %v584, %v776
        %v940 = vsel %vm462, %v586, %v778
        %v941 = vsel %vm462, %v588, %v780
        %v942 = vsel %vm462, %v590, %v782
        %v943 = vsel %vm462, %v592, %v784
        %v944 = vsel %vm462, %v594, %v786
        %v945 = vsel %vm462, %v596, %v788
        %v946 = vsel %vm462, %v598, %v790
        %v947 = vsel %vm462, %v600, %v792
        %v948 = vsel %vm462, %v602, %v794
        %v949 = vsel %vm462, %v604, %v796
        %v950 = vsel %vm462, %v606, %v798
        %v951 = vsel %vm462, %v608, %v800
        %v952 = vsel %vm462, %v610, %v802
        %v953 = vsel %vm462, %v612, %v804
        %v954 = vsel %vm462, %v614, %v806
        %v955 = vsel %vm462, %v616, %v808
        %v956 = vsel %vm462, %v618, %v810
        %v957 = vsel %vm462, %v620, %v812
        %v958 = vsel %vm462, %v622, %v814
        %v959 = vsel %vm462, %v624, %v816
        %v960 = vsel %vm462, %v626, %v818
        %v961 = vsel %vm462, %v628, %v820
        %v962 = vsel %vm462, %v630, %v822
        %v963 = vsel %vm462, %v632, %v824
        %v964 = vsel %vm462, %v634, %v826
        %v965 = vsel %vm462, %v636, %v828
        %v966 = vsel %vm462, %v638, %v830
        %v967 = vsel %vm462, %v640, %v832
        %v968 = vsel %vm462, %v642, %v834
        %v969 = vsel %vm462, %v644, %v836
        %v970 = vsel %vm462, %v646, %v838
        %v971 = vsel %vm462, %v648, %v840
        %v972 = vsel %vm462, %v650, %v842
        %v973 = vsel %vm462, %v652, %v844
        %v974 = vsel %vm462, %v654, %v846
        %975 = vrot.lane.b32.xlu0 %v142, 2
        %v976 = vpop.permute.xlu0 %975
        %977 = vrot.lane.b32.xlu0 %v143, 2
        %v978 = vpop.permute.xlu0 %977
        %979 = vrot.lane.b32.xlu0 %v144, 2
        %v980 = vpop.permute.xlu0 %979
        %981 = vrot.lane.b32.xlu0 %v145, 2
        %v982 = vpop.permute.xlu0 %981
        %983 = vrot.lane.b32.xlu0 %v146, 2
        %v984 = vpop.permute.xlu0 %983
        %985 = vrot.lane.b32.xlu0 %v147, 2
        %v986 = vpop.permute.xlu0 %985
        %987 = vrot.lane.b32.xlu0 %v148, 2
        %v988 = vpop.permute.xlu0 %987
        %989 = vrot.lane.b32.xlu0 %v149, 2
        %v990 = vpop.permute.xlu0 %989
        %991 = vrot.lane.b32.xlu0 %v150, 2
        %v992 = vpop.permute.xlu0 %991
        %993 = vrot.lane.b32.xlu0 %v151, 2
        %v994 = vpop.permute.xlu0 %993
        %995 = vrot.lane.b32.xlu0 %v152, 2
        %v996 = vpop.permute.xlu0 %995
        %997 = vrot.lane.b32.xlu0 %v153, 2
        %v998 = vpop.permute.xlu0 %997
        %999 = vrot.lane.b32.xlu0 %v154, 2
        %v1000 = vpop.permute.xlu0 %999
        %1001 = vrot.lane.b32.xlu0 %v155, 2
        %v1002 = vpop.permute.xlu0 %1001
        %1003 = vrot.lane.b32.xlu0 %v156, 2
        %v1004 = vpop.permute.xlu0 %1003
        %1005 = vrot.lane.b32.xlu0 %v157, 2
        %v1006 = vpop.permute.xlu0 %1005
        %1007 = vrot.lane.b32.xlu0 %v158, 2
        %v1008 = vpop.permute.xlu0 %1007
        %1009 = vrot.lane.b32.xlu0 %v159, 2
        %v1010 = vpop.permute.xlu0 %1009
        %1011 = vrot.lane.b32.xlu0 %v160, 2
        %v1012 = vpop.permute.xlu0 %1011
        %1013 = vrot.lane.b32.xlu0 %v161, 2
        %v1014 = vpop.permute.xlu0 %1013
        %1015 = vrot.lane.b32.xlu0 %v162, 2
        %v1016 = vpop.permute.xlu0 %1015
        %1017 = vrot.lane.b32.xlu0 %v163, 2
        %v1018 = vpop.permute.xlu0 %1017
        %1019 = vrot.lane.b32.xlu0 %v164, 2
        %v1020 = vpop.permute.xlu0 %1019
        %1021 = vrot.lane.b32.xlu0 %v165, 2
        %v1022 = vpop.permute.xlu0 %1021
        %1023 = vrot.lane.b32.xlu0 %v166, 2
        %v1024 = vpop.permute.xlu0 %1023
        %1025 = vrot.lane.b32.xlu0 %v167, 2
        %v1026 = vpop.permute.xlu0 %1025
        %1027 = vrot.lane.b32.xlu0 %v168, 2
        %v1028 = vpop.permute.xlu0 %1027
        %1029 = vrot.lane.b32.xlu0 %v169, 2
        %v1030 = vpop.permute.xlu0 %1029
        %1031 = vrot.lane.b32.xlu0 %v170, 2
        %v1032 = vpop.permute.xlu0 %1031
        %1033 = vrot.lane.b32.xlu0 %v171, 2
        %v1034 = vpop.permute.xlu0 %1033
        %1035 = vrot.lane.b32.xlu0 %v172, 2
        %v1036 = vpop.permute.xlu0 %1035
        %1037 = vrot.lane.b32.xlu0 %v173, 2
        %v1038 = vpop.permute.xlu0 %1037
        %1039 = vrot.lane.b32.xlu0 %v174, 2
        %v1040 = vpop.permute.xlu0 %1039
        %1041 = vrot.lane.b32.xlu0 %v175, 2
        %v1042 = vpop.permute.xlu0 %1041
        %1043 = vrot.lane.b32.xlu0 %v176, 2
        %v1044 = vpop.permute.xlu0 %1043
        %1045 = vrot.lane.b32.xlu0 %v177, 2
        %v1046 = vpop.permute.xlu0 %1045
        %1047 = vrot.lane.b32.xlu0 %v178, 2
        %v1048 = vpop.permute.xlu0 %1047
        %1049 = vrot.lane.b32.xlu0 %v179, 2
        %v1050 = vpop.permute.xlu0 %1049
        %1051 = vrot.lane.b32.xlu0 %v180, 2
        %v1052 = vpop.permute.xlu0 %1051
        %1053 = vrot.lane.b32.xlu0 %v181, 2
        %v1054 = vpop.permute.xlu0 %1053
        %1055 = vrot.lane.b32.xlu0 %v182, 2
        %v1056 = vpop.permute.xlu0 %1055
        %1057 = vrot.lane.b32.xlu0 %v183, 2
        %v1058 = vpop.permute.xlu0 %1057
        %1059 = vrot.lane.b32.xlu0 %v184, 2
        %v1060 = vpop.permute.xlu0 %1059
        %1061 = vrot.lane.b32.xlu0 %v185, 2
        %v1062 = vpop.permute.xlu0 %1061
        %1063 = vrot.lane.b32.xlu0 %v186, 2
        %v1064 = vpop.permute.xlu0 %1063
        %1065 = vrot.lane.b32.xlu0 %v187, 2
        %v1066 = vpop.permute.xlu0 %1065
        %1067 = vrot.lane.b32.xlu0 %v188, 2
        %v1068 = vpop.permute.xlu0 %1067
        %1069 = vrot.lane.b32.xlu0 %v189, 2
        %v1070 = vpop.permute.xlu0 %1069
        %1071 = vrot.lane.b32.xlu0 %v190, 2
        %v1072 = vpop.permute.xlu0 %1071
        %1073 = vrot.lane.b32.xlu0 %v191, 2
        %v1074 = vpop.permute.xlu0 %1073
        %1075 = vrot.lane.b32.xlu0 %v192, 2
        %v1076 = vpop.permute.xlu0 %1075
        %1077 = vrot.lane.b32.xlu0 %v193, 2
        %v1078 = vpop.permute.xlu0 %1077
        %1079 = vrot.lane.b32.xlu0 %v194, 2
        %v1080 = vpop.permute.xlu0 %1079
        %1081 = vrot.lane.b32.xlu0 %v195, 2
        %v1082 = vpop.permute.xlu0 %1081
        %1083 = vrot.lane.b32.xlu0 %v196, 2
        %v1084 = vpop.permute.xlu0 %1083
        %1085 = vrot.lane.b32.xlu0 %v197, 2
        %v1086 = vpop.permute.xlu0 %1085
        %1087 = vrot.lane.b32.xlu0 %v198, 2
        %v1088 = vpop.permute.xlu0 %1087
        %1089 = vrot.lane.b32.xlu0 %v199, 2
        %v1090 = vpop.permute.xlu0 %1089
        %1091 = vrot.lane.b32.xlu0 %v200, 2
        %v1092 = vpop.permute.xlu0 %1091
        %1093 = vrot.lane.b32.xlu0 %v201, 2
        %v1094 = vpop.permute.xlu0 %1093
        %1095 = vrot.lane.b32.xlu0 %v202, 2
        %v1096 = vpop.permute.xlu0 %1095
        %1097 = vrot.lane.b32.xlu0 %v203, 2
        %v1098 = vpop.permute.xlu0 %1097
        %1099 = vrot.lane.b32.xlu0 %v204, 2
        %v1100 = vpop.permute.xlu0 %1099
        %1101 = vrot.lane.b32.xlu0 %v205, 2
        %v1102 = vpop.permute.xlu0 %1101
        %1231 = vrot.lane.b32.xlu0 %v911, 18
        %v1232 = vpop.permute.xlu0 %1231
        %1233 = vrot.lane.b32.xlu0 %v912, 18
        %v1234 = vpop.permute.xlu0 %1233
        %1235 = vrot.lane.b32.xlu0 %v913, 18
        %v1236 = vpop.permute.xlu0 %1235
        %1237 = vrot.lane.b32.xlu0 %v914, 18
        %v1238 = vpop.permute.xlu0 %1237
        %1239 = vrot.lane.b32.xlu0 %v915, 18
        %v1240 = vpop.permute.xlu0 %1239
        %1241 = vrot.lane.b32.xlu0 %v916, 18
        %v1242 = vpop.permute.xlu0 %1241
        %1243 = vrot.lane.b32.xlu0 %v917, 18
        %v1244 = vpop.permute.xlu0 %1243
        %1245 = vrot.lane.b32.xlu0 %v918, 18
        %v1246 = vpop.permute.xlu0 %1245
        %1247 = vrot.lane.b32.xlu0 %v919, 18
        %v1248 = vpop.permute.xlu0 %1247
        %1249 = vrot.lane.b32.xlu0 %v920, 18
        %v1250 = vpop.permute.xlu0 %1249
        %1251 = vrot.lane.b32.xlu0 %v921, 18
        %v1252 = vpop.permute.xlu0 %1251
        %1253 = vrot.lane.b32.xlu0 %v922, 18
        %v1254 = vpop.permute.xlu0 %1253
        %1255 = vrot.lane.b32.xlu0 %v923, 18
        %v1256 = vpop.permute.xlu0 %1255
        %1257 = vrot.lane.b32.xlu0 %v924, 18
        %v1258 = vpop.permute.xlu0 %1257
        %1259 = vrot.lane.b32.xlu0 %v925, 18
        %v1260 = vpop.permute.xlu0 %1259
        %1261 = vrot.lane.b32.xlu0 %v926, 18
        %v1262 = vpop.permute.xlu0 %1261
        %1263 = vrot.lane.b32.xlu0 %v927, 18
        %v1264 = vpop.permute.xlu0 %1263
        %1265 = vrot.lane.b32.xlu0 %v928, 18
        %v1266 = vpop.permute.xlu0 %1265
        %1267 = vrot.lane.b32.xlu0 %v929, 18
        %v1268 = vpop.permute.xlu0 %1267
        %1269 = vrot.lane.b32.xlu0 %v930, 18
        %v1270 = vpop.permute.xlu0 %1269
        %1271 = vrot.lane.b32.xlu0 %v931, 18
        %v1272 = vpop.permute.xlu0 %1271
        %1273 = vrot.lane.b32.xlu0 %v932, 18
        %v1274 = vpop.permute.xlu0 %1273
        %1275 = vrot.lane.b32.xlu0 %v933, 18
        %v1276 = vpop.permute.xlu0 %1275
        %1277 = vrot.lane.b32.xlu0 %v934, 18
        %v1278 = vpop.permute.xlu0 %1277
        %1279 = vrot.lane.b32.xlu0 %v935, 18
        %v1280 = vpop.permute.xlu0 %1279
        %1281 = vrot.lane.b32.xlu0 %v936, 18
        %v1282 = vpop.permute.xlu0 %1281
        %1283 = vrot.lane.b32.xlu0 %v937, 18
        %v1284 = vpop.permute.xlu0 %1283
        %1285 = vrot.lane.b32.xlu0 %v938, 18
        %v1286 = vpop.permute.xlu0 %1285
        %1287 = vrot.lane.b32.xlu0 %v939, 18
        %v1288 = vpop.permute.xlu0 %1287
        %1289 = vrot.lane.b32.xlu0 %v940, 18
        %v1290 = vpop.permute.xlu0 %1289
        %1291 = vrot.lane.b32.xlu0 %v941, 18
        %v1292 = vpop.permute.xlu0 %1291
        %1293 = vrot.lane.b32.xlu0 %v942, 18
        %v1294 = vpop.permute.xlu0 %1293
        %1295 = vrot.lane.b32.xlu0 %v943, 18
        %v1296 = vpop.permute.xlu0 %1295
        %1297 = vrot.lane.b32.xlu0 %v944, 18
        %v1298 = vpop.permute.xlu0 %1297
        %1299 = vrot.lane.b32.xlu0 %v945, 18
        %v1300 = vpop.permute.xlu0 %1299
        %1301 = vrot.lane.b32.xlu0 %v946, 18
        %v1302 = vpop.permute.xlu0 %1301
        %1303 = vrot.lane.b32.xlu0 %v947, 18
        %v1304 = vpop.permute.xlu0 %1303
        %1305 = vrot.lane.b32.xlu0 %v948, 18
        %v1306 = vpop.permute.xlu0 %1305
        %1307 = vrot.lane.b32.xlu0 %v949, 18
        %v1308 = vpop.permute.xlu0 %1307
        %1309 = vrot.lane.b32.xlu0 %v950, 18
        %v1310 = vpop.permute.xlu0 %1309
        %1311 = vrot.lane.b32.xlu0 %v951, 18
        %v1312 = vpop.permute.xlu0 %1311
        %1313 = vrot.lane.b32.xlu0 %v952, 18
        %v1314 = vpop.permute.xlu0 %1313
        %1315 = vrot.lane.b32.xlu0 %v953, 18
        %v1316 = vpop.permute.xlu0 %1315
        %1317 = vrot.lane.b32.xlu0 %v954, 18
        %v1318 = vpop.permute.xlu0 %1317
        %1319 = vrot.lane.b32.xlu0 %v955, 18
        %v1320 = vpop.permute.xlu0 %1319
        %1321 = vrot.lane.b32.xlu0 %v956, 18
        %v1322 = vpop.permute.xlu0 %1321
        %1323 = vrot.lane.b32.xlu0 %v957, 18
        %v1324 = vpop.permute.xlu0 %1323
        %1325 = vrot.lane.b32.xlu0 %v958, 18
        %v1326 = vpop.permute.xlu0 %1325
        %1327 = vrot.lane.b32.xlu0 %v959, 18
        %v1328 = vpop.permute.xlu0 %1327
        %1329 = vrot.lane.b32.xlu0 %v960, 18
        %v1330 = vpop.permute.xlu0 %1329
        %1331 = vrot.lane.b32.xlu0 %v961, 18
        %v1332 = vpop.permute.xlu0 %1331
        %1333 = vrot.lane.b32.xlu0 %v962, 18
        %v1334 = vpop.permute.xlu0 %1333
        %1335 = vrot.lane.b32.xlu0 %v963, 18
        %v1336 = vpop.permute.xlu0 %1335
        %1337 = vrot.lane.b32.xlu0 %v964, 18
        %v1338 = vpop.permute.xlu0 %1337
        %1339 = vrot.lane.b32.xlu0 %v965, 18
        %v1340 = vpop.permute.xlu0 %1339
        %1341 = vrot.lane.b32.xlu0 %v966, 18
        %v1342 = vpop.permute.xlu0 %1341
        %1343 = vrot.lane.b32.xlu0 %v967, 18
        %v1344 = vpop.permute.xlu0 %1343
        %1345 = vrot.lane.b32.xlu0 %v968, 18
        %v1346 = vpop.permute.xlu0 %1345
        %1347 = vrot.lane.b32.xlu0 %v969, 18
        %v1348 = vpop.permute.xlu0 %1347
        %1349 = vrot.lane.b32.xlu0 %v970, 18
        %v1350 = vpop.permute.xlu0 %1349
        %1351 = vrot.lane.b32.xlu0 %v971, 18
        %v1352 = vpop.permute.xlu0 %1351
        %1353 = vrot.lane.b32.xlu0 %v972, 18
        %v1354 = vpop.permute.xlu0 %1353
        %1355 = vrot.lane.b32.xlu0 %v973, 18
        %v1356 = vpop.permute.xlu0 %1355
        %1357 = vrot.lane.b32.xlu0 %v974, 18
        %v1358 = vpop.permute.xlu0 %1357
        %vm1423 = vcmask 15360
        %v1424 = vsel %vm1423, %v463, %v976
        %v1425 = vsel %vm1423, %v464, %v978
        %v1426 = vsel %vm1423, %v465, %v980
        %v1427 = vsel %vm1423, %v466, %v982
        %v1428 = vsel %vm1423, %v467, %v984
        %v1429 = vsel %vm1423, %v468, %v986
        %v1430 = vsel %vm1423, %v469, %v988
        %v1431 = vsel %vm1423, %v470, %v990
        %v1432 = vsel %vm1423, %v471, %v992
        %v1433 = vsel %vm1423, %v472, %v994
        %v1434 = vsel %vm1423, %v473, %v996
        %v1435 = vsel %vm1423, %v474, %v998
        %v1436 = vsel %vm1423, %v475, %v1000
        %v1437 = vsel %vm1423, %v476, %v1002
        %v1438 = vsel %vm1423, %v477, %v1004
        %v1439 = vsel %vm1423, %v478, %v1006
        %v1440 = vsel %vm1423, %v479, %v1008
        %v1441 = vsel %vm1423, %v480, %v1010
        %v1442 = vsel %vm1423, %v481, %v1012
        %v1443 = vsel %vm1423, %v482, %v1014
        %v1444 = vsel %vm1423, %v483, %v1016
        %v1445 = vsel %vm1423, %v484, %v1018
        %v1446 = vsel %vm1423, %v485, %v1020
        %v1447 = vsel %vm1423, %v486, %v1022
        %v1448 = vsel %vm1423, %v487, %v1024
        %v1449 = vsel %vm1423, %v488, %v1026
        %v1450 = vsel %vm1423, %v489, %v1028
        %v1451 = vsel %vm1423, %v490, %v1030
        %v1452 = vsel %vm1423, %v491, %v1032
        %v1453 = vsel %vm1423, %v492, %v1034
        %v1454 = vsel %vm1423, %v493, %v1036
        %v1455 = vsel %vm1423, %v494, %v1038
        %v1456 = vsel %vm1423, %v495, %v1040
        %v1457 = vsel %vm1423, %v496, %v1042
        %v1458 = vsel %vm1423, %v497, %v1044
        %v1459 = vsel %vm1423, %v498, %v1046
        %v1460 = vsel %vm1423, %v499, %v1048
        %v1461 = vsel %vm1423, %v500, %v1050
        %v1462 = vsel %vm1423, %v501, %v1052
        %v1463 = vsel %vm1423, %v502, %v1054
        %v1464 = vsel %vm1423, %v503, %v1056
        %v1465 = vsel %vm1423, %v504, %v1058
        %v1466 = vsel %vm1423, %v505, %v1060
        %v1467 = vsel %vm1423, %v506, %v1062
        %v1468 = vsel %vm1423, %v507, %v1064
        %v1469 = vsel %vm1423, %v508, %v1066
        %v1470 = vsel %vm1423, %v509, %v1068
        %v1471 = vsel %vm1423, %v510, %v1070
        %v1472 = vsel %vm1423, %v511, %v1072
        %v1473 = vsel %vm1423, %v512, %v1074
        %v1474 = vsel %vm1423, %v513, %v1076
        %v1475 = vsel %vm1423, %v514, %v1078
        %v1476 = vsel %vm1423, %v515, %v1080
        %v1477 = vsel %vm1423, %v516, %v1082
        %v1478 = vsel %vm1423, %v517, %v1084
        %v1479 = vsel %vm1423, %v518, %v1086
        %v1480 = vsel %vm1423, %v519, %v1088
        %v1481 = vsel %vm1423, %v520, %v1090
        %v1482 = vsel %vm1423, %v521, %v1092
        %v1483 = vsel %vm1423, %v522, %v1094
        %v1484 = vsel %vm1423, %v523, %v1096
        %v1485 = vsel %vm1423, %v524, %v1098
        %v1486 = vsel %vm1423, %v525, %v1100
        %v1487 = vsel %vm1423, %v526, %v1102
        %vm1488 = vcmask 146432
        %v1489 = vsel %vm1488, %v1424, %v1232
        %v1490 = vsel %vm1488, %v1425, %v1234
        %v1491 = vsel %vm1488, %v1426, %v1236
        %v1492 = vsel %vm1488, %v1427, %v1238
        %v1493 = vsel %vm1488, %v1428, %v1240
        %v1494 = vsel %vm1488, %v1429, %v1242
        %v1495 = vsel %vm1488, %v1430, %v1244
        %v1496 = vsel %vm1488, %v1431, %v1246
        %v1497 = vsel %vm1488, %v1432, %v1248
        %v1498 = vsel %vm1488, %v1433, %v1250
        %v1499 = vsel %vm1488, %v1434, %v1252
        %v1500 = vsel %vm1488, %v1435, %v1254
        %v1501 = vsel %vm1488, %v1436, %v1256
        %v1502 = vsel %vm1488, %v1437, %v1258
        %v1503 = vsel %vm1488, %v1438, %v1260
        %v1504 = vsel %vm1488, %v1439, %v1262
        %v1505 = vsel %vm1488, %v1440, %v1264
        %v1506 = vsel %vm1488, %v1441, %v1266
        %v1507 = vsel %vm1488, %v1442, %v1268
        %v1508 = vsel %vm1488, %v1443, %v1270
        %v1509 = vsel %vm1488, %v1444, %v1272
        %v1510 = vsel %vm1488, %v1445, %v1274
        %v1511 = vsel %vm1488, %v1446, %v1276
        %v1512 = vsel %vm1488, %v1447, %v1278
        %v1513 = vsel %vm1488, %v1448, %v1280
        %v1514 = vsel %vm1488, %v1449, %v1282
        %v1515 = vsel %vm1488, %v1450, %v1284
        %v1516 = vsel %vm1488, %v1451, %v1286
        %v1517 = vsel %vm1488, %v1452, %v1288
        %v1518 = vsel %vm1488, %v1453, %v1290
        %v1519 = vsel %vm1488, %v1454, %v1292
        %v1520 = vsel %vm1488, %v1455, %v1294
        %v1521 = vsel %vm1488, %v1456, %v1296
        %v1522 = vsel %vm1488, %v1457, %v1298
        %v1523 = vsel %vm1488, %v1458, %v1300
        %v1524 = vsel %vm1488, %v1459, %v1302
        %v1525 = vsel %vm1488, %v1460, %v1304
        %v1526 = vsel %vm1488, %v1461, %v1306
        %v1527 = vsel %vm1488, %v1462, %v1308
        %v1528 = vsel %vm1488, %v1463, %v1310
        %v1529 = vsel %vm1488, %v1464, %v1312
        %v1530 = vsel %vm1488, %v1465, %v1314
        %v1531 = vsel %vm1488, %v1466, %v1316
        %v1532 = vsel %vm1488, %v1467, %v1318
        %v1533 = vsel %vm1488, %v1468, %v1320
        %v1534 = vsel %vm1488, %v1469, %v1322
        %v1535 = vsel %vm1488, %v1470, %v1324
        %v1536 = vsel %vm1488, %v1471, %v1326
        %v1537 = vsel %vm1488, %v1472, %v1328
        %v1538 = vsel %vm1488, %v1473, %v1330
        %v1539 = vsel %vm1488, %v1474, %v1332
        %v1540 = vsel %vm1488, %v1475, %v1334
        %v1541 = vsel %vm1488, %v1476, %v1336
        %v1542 = vsel %vm1488, %v1477, %v1338
        %v1543 = vsel %vm1488, %v1478, %v1340
        %v1544 = vsel %vm1488, %v1479, %v1342
        %v1545 = vsel %vm1488, %v1480, %v1344
        %v1546 = vsel %vm1488, %v1481, %v1346
        %v1547 = vsel %vm1488, %v1482, %v1348
        %v1548 = vsel %vm1488, %v1483, %v1350
        %v1549 = vsel %vm1488, %v1484, %v1352
        %v1550 = vsel %vm1488, %v1485, %v1354
        %v1551 = vsel %vm1488, %v1486, %v1356
        %v1552 = vsel %vm1488, %v1487, %v1358
        %v1585 = vrot.slane %v1489, 2
        %v1586 = vrot.slane %v1491, 2
        %v1587 = vrot.slane %v1493, 2
        %v1588 = vrot.slane %v1495, 2
        %v1589 = vrot.slane %v1497, 2
        %v1590 = vrot.slane %v1499, 2
        %v1591 = vrot.slane %v1501, 2
        %v1592 = vrot.slane %v1503, 2
        %v1593 = vrot.slane %v1505, 2
        %v1594 = vrot.slane %v1507, 2
        %v1595 = vrot.slane %v1509, 2
        %v1596 = vrot.slane %v1511, 2
        %v1597 = vrot.slane %v1513, 2
        %v1598 = vrot.slane %v1515, 2
        %v1599 = vrot.slane %v1517, 2
        %v1600 = vrot.slane %v1519, 2
        %v1601 = vrot.slane %v1521, 2
        %v1602 = vrot.slane %v1523, 2
        %v1603 = vrot.slane %v1525, 2
        %v1604 = vrot.slane %v1527, 2
        %v1605 = vrot.slane %v1529, 2
        %v1606 = vrot.slane %v1531, 2
        %v1607 = vrot.slane %v1533, 2
        %v1608 = vrot.slane %v1535, 2
        %v1609 = vrot.slane %v1537, 2
        %v1610 = vrot.slane %v1539, 2
        %v1611 = vrot.slane %v1541, 2
        %v1612 = vrot.slane %v1543, 2
        %v1613 = vrot.slane %v1545, 2
        %v1614 = vrot.slane %v1547, 2
        %v1615 = vrot.slane %v1549, 2
        %v1616 = vrot.slane %v1551, 2
        %vm1649 = vcmask 1040384
        %v1650 = vsel %vm1649, %v1585, %v1489
        %v1651 = vsel %vm1649, %v1586, %v1491
        %v1652 = vsel %vm1649, %v1587, %v1493
        %v1653 = vsel %vm1649, %v1588, %v1495
        %v1654 = vsel %vm1649, %v1589, %v1497
        %v1655 = vsel %vm1649, %v1590, %v1499
        %v1656 = vsel %vm1649, %v1591, %v1501
        %v1657 = vsel %vm1649, %v1592, %v1503
        %v1658 = vsel %vm1649, %v1593, %v1505
        %v1659 = vsel %vm1649, %v1594, %v1507
        %v1660 = vsel %vm1649, %v1595, %v1509
        %v1661 = vsel %vm1649, %v1596, %v1511
        %v1662 = vsel %vm1649, %v1597, %v1513
        %v1663 = vsel %vm1649, %v1598, %v1515
        %v1664 = vsel %vm1649, %v1599, %v1517
        %v1665 = vsel %vm1649, %v1600, %v1519
        %v1666 = vsel %vm1649, %v1601, %v1521
        %v1667 = vsel %vm1649, %v1602, %v1523
        %v1668 = vsel %vm1649, %v1603, %v1525
        %v1669 = vsel %vm1649, %v1604, %v1527
        %v1670 = vsel %vm1649, %v1605, %v1529
        %v1671 = vsel %vm1649, %v1606, %v1531
        %v1672 = vsel %vm1649, %v1607, %v1533
        %v1673 = vsel %vm1649, %v1608, %v1535
        %v1674 = vsel %vm1649, %v1609, %v1537
        %v1675 = vsel %vm1649, %v1610, %v1539
        %v1676 = vsel %vm1649, %v1611, %v1541
        %v1677 = vsel %vm1649, %v1612, %v1543
        %v1678 = vsel %vm1649, %v1613, %v1545
        %v1679 = vsel %vm1649, %v1614, %v1547
        %v1680 = vsel %vm1649, %v1615, %v1549
        %v1681 = vsel %vm1649, %v1616, %v1551
        %v1714 = vrot.slane %v1490, 6
        %v1715 = vrot.slane %v1492, 6
        %v1716 = vrot.slane %v1494, 6
        %v1717 = vrot.slane %v1496, 6
        %v1718 = vrot.slane %v1498, 6
        %v1719 = vrot.slane %v1500, 6
        %v1720 = vrot.slane %v1502, 6
        %v1721 = vrot.slane %v1504, 6
        %v1722 = vrot.slane %v1506, 6
        %v1723 = vrot.slane %v1508, 6
        %v1724 = vrot.slane %v1510, 6
        %v1725 = vrot.slane %v1512, 6
        %v1726 = vrot.slane %v1514, 6
        %v1727 = vrot.slane %v1516, 6
        %v1728 = vrot.slane %v1518, 6
        %v1729 = vrot.slane %v1520, 6
        %v1730 = vrot.slane %v1522, 6
        %v1731 = vrot.slane %v1524, 6
        %v1732 = vrot.slane %v1526, 6
        %v1733 = vrot.slane %v1528, 6
        %v1734 = vrot.slane %v1530, 6
        %v1735 = vrot.slane %v1532, 6
        %v1736 = vrot.slane %v1534, 6
        %v1737 = vrot.slane %v1536, 6
        %v1738 = vrot.slane %v1538, 6
        %v1739 = vrot.slane %v1540, 6
        %v1740 = vrot.slane %v1542, 6
        %v1741 = vrot.slane %v1544, 6
        %v1742 = vrot.slane %v1546, 6
        %v1743 = vrot.slane %v1548, 6
        %v1744 = vrot.slane %v1550, 6
        %v1745 = vrot.slane %v1552, 6
        %v1778 = vrot.slane %v1490, 4
        %v1779 = vrot.slane %v1492, 4
        %v1780 = vrot.slane %v1494, 4
        %v1781 = vrot.slane %v1496, 4
        %v1782 = vrot.slane %v1498, 4
        %v1783 = vrot.slane %v1500, 4
        %v1784 = vrot.slane %v1502, 4
        %v1785 = vrot.slane %v1504, 4
        %v1786 = vrot.slane %v1506, 4
        %v1787 = vrot.slane %v1508, 4
        %v1788 = vrot.slane %v1510, 4
        %v1789 = vrot.slane %v1512, 4
        %v1790 = vrot.slane %v1514, 4
        %v1791 = vrot.slane %v1516, 4
        %v1792 = vrot.slane %v1518, 4
        %v1793 = vrot.slane %v1520, 4
        %v1794 = vrot.slane %v1522, 4
        %v1795 = vrot.slane %v1524, 4
        %v1796 = vrot.slane %v1526, 4
        %v1797 = vrot.slane %v1528, 4
        %v1798 = vrot.slane %v1530, 4
        %v1799 = vrot.slane %v1532, 4
        %v1800 = vrot.slane %v1534, 4
        %v1801 = vrot.slane %v1536, 4
        %v1802 = vrot.slane %v1538, 4
        %v1803 = vrot.slane %v1540, 4
        %v1804 = vrot.slane %v1542, 4
        %v1805 = vrot.slane %v1544, 4
        %v1806 = vrot.slane %v1546, 4
        %v1807 = vrot.slane %v1548, 4
        %v1808 = vrot.slane %v1550, 4
        %v1809 = vrot.slane %v1552, 4
        %v1842 = vsel %vm1649, %v1714, %v1778
        %v1843 = vsel %vm1649, %v1715, %v1779
        %v1844 = vsel %vm1649, %v1716, %v1780
        %v1845 = vsel %vm1649, %v1717, %v1781
        %v1846 = vsel %vm1649, %v1718, %v1782
        %v1847 = vsel %vm1649, %v1719, %v1783
        %v1848 = vsel %vm1649, %v1720, %v1784
        %v1849 = vsel %vm1649, %v1721, %v1785
        %v1850 = vsel %vm1649, %v1722, %v1786
        %v1851 = vsel %vm1649, %v1723, %v1787
        %v1852 = vsel %vm1649, %v1724, %v1788
        %v1853 = vsel %vm1649, %v1725, %v1789
        %v1854 = vsel %vm1649, %v1726, %v1790
        %v1855 = vsel %vm1649, %v1727, %v1791
        %v1856 = vsel %vm1649, %v1728, %v1792
        %v1857 = vsel %vm1649, %v1729, %v1793
        %v1858 = vsel %vm1649, %v1730, %v1794
        %v1859 = vsel %vm1649, %v1731, %v1795
        %v1860 = vsel %vm1649, %v1732, %v1796
        %v1861 = vsel %vm1649, %v1733, %v1797
        %v1862 = vsel %vm1649, %v1734, %v1798
        %v1863 = vsel %vm1649, %v1735, %v1799
        %v1864 = vsel %vm1649, %v1736, %v1800
        %v1865 = vsel %vm1649, %v1737, %v1801
        %v1866 = vsel %vm1649, %v1738, %v1802
        %v1867 = vsel %vm1649, %v1739, %v1803
        %v1868 = vsel %vm1649, %v1740, %v1804
        %v1869 = vsel %vm1649, %v1741, %v1805
        %v1870 = vsel %vm1649, %v1742, %v1806
        %v1871 = vsel %vm1649, %v1743, %v1807
        %v1872 = vsel %vm1649, %v1744, %v1808
        %v1873 = vsel %vm1649, %v1745, %v1809
        %vm1874 = vcmask 1041408
        %v1875 = vrot.slane %v1489, 6
        %v1876 = vsel %vm1874, %v1875, %v1714
        %v1877 = vrot.slane %v1491, 6
        %v1878 = vsel %vm1874, %v1877, %v1715
        %v1879 = vrot.slane %v1493, 6
        %v1880 = vsel %vm1874, %v1879, %v1716
        %v1881 = vrot.slane %v1495, 6
        %v1882 = vsel %vm1874, %v1881, %v1717
        %v1883 = vrot.slane %v1497, 6
        %v1884 = vsel %vm1874, %v1883, %v1718
        %v1885 = vrot.slane %v1499, 6
        %v1886 = vsel %vm1874, %v1885, %v1719
        %v1887 = vrot.slane %v1501, 6
        %v1888 = vsel %vm1874, %v1887, %v1720
        %v1889 = vrot.slane %v1503, 6
        %v1890 = vsel %vm1874, %v1889, %v1721
        %v1891 = vrot.slane %v1505, 6
        %v1892 = vsel %vm1874, %v1891, %v1722
        %v1893 = vrot.slane %v1507, 6
        %v1894 = vsel %vm1874, %v1893, %v1723
        %v1895 = vrot.slane %v1509, 6
        %v1896 = vsel %vm1874, %v1895, %v1724
        %v1897 = vrot.slane %v1511, 6
        %v1898 = vsel %vm1874, %v1897, %v1725
        %v1899 = vrot.slane %v1513, 6
        %v1900 = vsel %vm1874, %v1899, %v1726
        %v1901 = vrot.slane %v1515, 6
        %v1902 = vsel %vm1874, %v1901, %v1727
        %v1903 = vrot.slane %v1517, 6
        %v1904 = vsel %vm1874, %v1903, %v1728
        %v1905 = vrot.slane %v1519, 6
        %v1906 = vsel %vm1874, %v1905, %v1729
        %v1907 = vrot.slane %v1521, 6
        %v1908 = vsel %vm1874, %v1907, %v1730
        %v1909 = vrot.slane %v1523, 6
        %v1910 = vsel %vm1874, %v1909, %v1731
        %v1911 = vrot.slane %v1525, 6
        %v1912 = vsel %vm1874, %v1911, %v1732
        %v1913 = vrot.slane %v1527, 6
        %v1914 = vsel %vm1874, %v1913, %v1733
        %v1915 = vrot.slane %v1529, 6
        %v1916 = vsel %vm1874, %v1915, %v1734
        %v1917 = vrot.slane %v1531, 6
        %v1918 = vsel %vm1874, %v1917, %v1735
        %v1919 = vrot.slane %v1533, 6
        %v1920 = vsel %vm1874, %v1919, %v1736
        %v1921 = vrot.slane %v1535, 6
        %v1922 = vsel %vm1874, %v1921, %v1737
        %v1923 = vrot.slane %v1537, 6
        %v1924 = vsel %vm1874, %v1923, %v1738
        %v1925 = vrot.slane %v1539, 6
        %v1926 = vsel %vm1874, %v1925, %v1739
        %v1927 = vrot.slane %v1541, 6
        %v1928 = vsel %vm1874, %v1927, %v1740
        %v1929 = vrot.slane %v1543, 6
        %v1930 = vsel %vm1874, %v1929, %v1741
        %v1931 = vrot.slane %v1545, 6
        %v1932 = vsel %vm1874, %v1931, %v1742
        %v1933 = vrot.slane %v1547, 6
        %v1934 = vsel %vm1874, %v1933, %v1743
        %v1935 = vrot.slane %v1549, 6
        %v1936 = vsel %vm1874, %v1935, %v1744
        %v1937 = vrot.slane %v1551, 6
        %v1938 = vsel %vm1874, %v1937, %v1745
        %v2035 = vrot.slane %v1842, 6
        %v2036 = vrot.slane %v1843, 6
        %v2037 = vrot.slane %v1844, 6
        %v2038 = vrot.slane %v1845, 6
        %v2039 = vrot.slane %v1846, 6
        %v2040 = vrot.slane %v1847, 6
        %v2041 = vrot.slane %v1848, 6
        %v2042 = vrot.slane %v1849, 6
        %v2043 = vrot.slane %v1850, 6
        %v2044 = vrot.slane %v1851, 6
        %v2045 = vrot.slane %v1852, 6
        %v2046 = vrot.slane %v1853, 6
        %v2047 = vrot.slane %v1854, 6
        %v2048 = vrot.slane %v1855, 6
        %v2049 = vrot.slane %v1856, 6
        %v2050 = vrot.slane %v1857, 6
        %v2051 = vrot.slane %v1858, 6
        %v2052 = vrot.slane %v1859, 6
        %v2053 = vrot.slane %v1860, 6
        %v2054 = vrot.slane %v1861, 6
        %v2055 = vrot.slane %v1862, 6
        %v2056 = vrot.slane %v1863, 6
        %v2057 = vrot.slane %v1864, 6
        %v2058 = vrot.slane %v1865, 6
        %v2059 = vrot.slane %v1866, 6
        %v2060 = vrot.slane %v1867, 6
        %v2061 = vrot.slane %v1868, 6
        %v2062 = vrot.slane %v1869, 6
        %v2063 = vrot.slane %v1870, 6
        %v2064 = vrot.slane %v1871, 6
        %v2065 = vrot.slane %v1872, 6
        %v2066 = vrot.slane %v1873, 6
        %v2099 = vsel %vm1874, %v1650, %v1875
        %v2100 = vsel %vm1874, %v1651, %v1877
        %v2101 = vsel %vm1874, %v1652, %v1879
        %v2102 = vsel %vm1874, %v1653, %v1881
        %v2103 = vsel %vm1874, %v1654, %v1883
        %v2104 = vsel %vm1874, %v1655, %v1885
        %v2105 = vsel %vm1874, %v1656, %v1887
        %v2106 = vsel %vm1874, %v1657, %v1889
        %v2107 = vsel %vm1874, %v1658, %v1891
        %v2108 = vsel %vm1874, %v1659, %v1893
        %v2109 = vsel %vm1874, %v1660, %v1895
        %v2110 = vsel %vm1874, %v1661, %v1897
        %v2111 = vsel %vm1874, %v1662, %v1899
        %v2112 = vsel %vm1874, %v1663, %v1901
        %v2113 = vsel %vm1874, %v1664, %v1903
        %v2114 = vsel %vm1874, %v1665, %v1905
        %v2115 = vsel %vm1874, %v1666, %v1907
        %v2116 = vsel %vm1874, %v1667, %v1909
        %v2117 = vsel %vm1874, %v1668, %v1911
        %v2118 = vsel %vm1874, %v1669, %v1913
        %v2119 = vsel %vm1874, %v1670, %v1915
        %v2120 = vsel %vm1874, %v1671, %v1917
        %v2121 = vsel %vm1874, %v1672, %v1919
        %v2122 = vsel %vm1874, %v1673, %v1921
        %v2123 = vsel %vm1874, %v1674, %v1923
        %v2124 = vsel %vm1874, %v1675, %v1925
        %v2125 = vsel %vm1874, %v1676, %v1927
        %v2126 = vsel %vm1874, %v1677, %v1929
        %v2127 = vsel %vm1874, %v1678, %v1931
        %v2128 = vsel %vm1874, %v1679, %v1933
        %v2129 = vsel %vm1874, %v1680, %v1935
        %v2130 = vsel %vm1874, %v1681, %v1937
        %v2131 = vsel %vm1874, %v1714, %v2035
        %v2132 = vsel %vm1874, %v1715, %v2036
        %v2133 = vsel %vm1874, %v1716, %v2037
        %v2134 = vsel %vm1874, %v1717, %v2038
        %v2135 = vsel %vm1874, %v1718, %v2039
        %v2136 = vsel %vm1874, %v1719, %v2040
        %v2137 = vsel %vm1874, %v1720, %v2041
        %v2138 = vsel %vm1874, %v1721, %v2042
        %v2139 = vsel %vm1874, %v1722, %v2043
        %v2140 = vsel %vm1874, %v1723, %v2044
        %v2141 = vsel %vm1874, %v1724, %v2045
        %v2142 = vsel %vm1874, %v1725, %v2046
        %v2143 = vsel %vm1874, %v1726, %v2047
        %v2144 = vsel %vm1874, %v1727, %v2048
        %v2145 = vsel %vm1874, %v1728, %v2049
        %v2146 = vsel %vm1874, %v1729, %v2050
        %v2147 = vsel %vm1874, %v1730, %v2051
        %v2148 = vsel %vm1874, %v1731, %v2052
        %v2149 = vsel %vm1874, %v1732, %v2053
        %v2150 = vsel %vm1874, %v1733, %v2054
        %v2151 = vsel %vm1874, %v1734, %v2055
        %v2152 = vsel %vm1874, %v1735, %v2056
        %v2153 = vsel %vm1874, %v1736, %v2057
        %v2154 = vsel %vm1874, %v1737, %v2058
        %v2155 = vsel %vm1874, %v1738, %v2059
        %v2156 = vsel %vm1874, %v1739, %v2060
        %v2157 = vsel %vm1874, %v1740, %v2061
        %v2158 = vsel %vm1874, %v1741, %v2062
        %v2159 = vsel %vm1874, %v1742, %v2063
        %v2160 = vsel %vm1874, %v1743, %v2064
        %v2161 = vsel %vm1874, %v1744, %v2065
        %v2162 = vsel %vm1874, %v1745, %v2066
        %s2163 = scalar_lea.vmem %s140, 48
        %vm2164 = vcmask 162816
        %2165 = vst.msk [vmem:[%s2163] sm:$0xff] %vm2164, %v2099
        %2166 = vst.msk [vmem:[%s2163 + $0x8] sm:$0xff] %vm2164, %v1876
        %vm2167 = vcmask 158720
        %2168 = vst.msk [vmem:[%s2163 + $0x10] sm:$0xf] %vm2167, %v2131
        %2169 = vst.msk [vmem:[%s2163 + $0x18] sm:$0xff] %vm2164, %v2100
        %2170 = vst.msk [vmem:[%s2163 + $0x20] sm:$0xff] %vm2164, %v1878
        %2171 = vst.msk [vmem:[%s2163 + $0x28] sm:$0xf] %vm2167, %v2132
        %2172 = vst.msk [vmem:[%s2163 + $0x30] sm:$0xff] %vm2164, %v2101
        %2173 = vst.msk [vmem:[%s2163 + $0x38] sm:$0xff] %vm2164, %v1880
        %2174 = vst.msk [vmem:[%s2163 + $0x40] sm:$0xf] %vm2167, %v2133
        %2175 = vst.msk [vmem:[%s2163 + $0x48] sm:$0xff] %vm2164, %v2102
        %2176 = vst.msk [vmem:[%s2163 + $0x50] sm:$0xff] %vm2164, %v1882
        %2177 = vst.msk [vmem:[%s2163 + $0x58] sm:$0xf] %vm2167, %v2134
        %2178 = vst.msk [vmem:[%s2163 + $0x60] sm:$0xff] %vm2164, %v2103
        %2179 = vst.msk [vmem:[%s2163 + $0x68] sm:$0xff] %vm2164, %v1884
        %2180 = vst.msk [vmem:[%s2163 + $0x70] sm:$0xf] %vm2167, %v2135
        %2181 = vst.msk [vmem:[%s2163 + $0x78] sm:$0xff] %vm2164, %v2104
        %2182 = vst.msk [vmem:[%s2163 + $0x80] sm:$0xff] %vm2164, %v1886
        %2183 = vst.msk [vmem:[%s2163 + $0x88] sm:$0xf] %vm2167, %v2136
        %2184 = vst.msk [vmem:[%s2163 + $0x90] sm:$0xff] %vm2164, %v2105
        %2185 = vst.msk [vmem:[%s2163 + $0x98] sm:$0xff] %vm2164, %v1888
        %2186 = vst.msk [vmem:[%s2163 + $0xa0] sm:$0xf] %vm2167, %v2137
        %2187 = vst.msk [vmem:[%s2163 + $0xa8] sm:$0xff] %vm2164, %v2106
        %2188 = vst.msk [vmem:[%s2163 + $0xb0] sm:$0xff] %vm2164, %v1890
        %2189 = vst.msk [vmem:[%s2163 + $0xb8] sm:$0xf] %vm2167, %v2138
        %2190 = vst.msk [vmem:[%s2163 + $0x120] sm:$0xff] %vm2164, %v2107
        %2191 = vst.msk [vmem:[%s2163 + $0x128] sm:$0xff] %vm2164, %v1892
        %2192 = vst.msk [vmem:[%s2163 + $0x130] sm:$0xf] %vm2167, %v2139
        %2193 = vst.msk [vmem:[%s2163 + $0x138] sm:$0xff] %vm2164, %v2108
        %2194 = vst.msk [vmem:[%s2163 + $0x140] sm:$0xff] %vm2164, %v1894
        %2195 = vst.msk [vmem:[%s2163 + $0x148] sm:$0xf] %vm2167, %v2140
        %2196 = vst.msk [vmem:[%s2163 + $0x150] sm:$0xff] %vm2164, %v2109
        %2197 = vst.msk [vmem:[%s2163 + $0x158] sm:$0xff] %vm2164, %v1896
        %2198 = vst.msk [vmem:[%s2163 + $0x160] sm:$0xf] %vm2167, %v2141
        %2199 = vst.msk [vmem:[%s2163 + $0x168] sm:$0xff] %vm2164, %v2110
        %2200 = vst.msk [vmem:[%s2163 + $0x170] sm:$0xff] %vm2164, %v1898
        %2201 = vst.msk [vmem:[%s2163 + $0x178] sm:$0xf] %vm2167, %v2142
        %2202 = vst.msk [vmem:[%s2163 + $0x180] sm:$0xff] %vm2164, %v2111
        %2203 = vst.msk [vmem:[%s2163 + $0x188] sm:$0xff] %vm2164, %v1900
        %2204 = vst.msk [vmem:[%s2163 + $0x190] sm:$0xf] %vm2167, %v2143
        %2205 = vst.msk [vmem:[%s2163 + $0x198] sm:$0xff] %vm2164, %v2112
        %2206 = vst.msk [vmem:[%s2163 + $0x1a0] sm:$0xff] %vm2164, %v1902
        %2207 = vst.msk [vmem:[%s2163 + $0x1a8] sm:$0xf] %vm2167, %v2144
        %2208 = vst.msk [vmem:[%s2163 + $0x1b0] sm:$0xff] %vm2164, %v2113
        %2209 = vst.msk [vmem:[%s2163 + $0x1b8] sm:$0xff] %vm2164, %v1904
        %2210 = vst.msk [vmem:[%s2163 + $0x1c0] sm:$0xf] %vm2167, %v2145
        %2211 = vst.msk [vmem:[%s2163 + $0x1c8] sm:$0xff] %vm2164, %v2114
        %2212 = vst.msk [vmem:[%s2163 + $0x1d0] sm:$0xff] %vm2164, %v1906
        %2213 = vst.msk [vmem:[%s2163 + $0x1d8] sm:$0xf] %vm2167, %v2146
        %2214 = vst.msk [vmem:[%s2163 + $0x240] sm:$0xff] %vm2164, %v2115
        %2215 = vst.msk [vmem:[%s2163 + $0x248] sm:$0xff] %vm2164, %v1908
        %2216 = vst.msk [vmem:[%s2163 + $0x250] sm:$0xf] %vm2167, %v2147
        %2217 = vst.msk [vmem:[%s2163 + $0x258] sm:$0xff] %vm2164, %v2116
        %2218 = vst.msk [vmem:[%s2163 + $0x260] sm:$0xff] %vm2164, %v1910
        %2219 = vst.msk [vmem:[%s2163 + $0x268] sm:$0xf] %vm2167, %v2148
        %2220 = vst.msk [vmem:[%s2163 + $0x270] sm:$0xff] %vm2164, %v2117
        %2221 = vst.msk [vmem:[%s2163 + $0x278] sm:$0xff] %vm2164, %v1912
        %2222 = vst.msk [vmem:[%s2163 + $0x280] sm:$0xf] %vm2167, %v2149
        %2223 = vst.msk [vmem:[%s2163 + $0x288] sm:$0xff] %vm2164, %v2118
        %2224 = vst.msk [vmem:[%s2163 + $0x290] sm:$0xff] %vm2164, %v1914
        %2225 = vst.msk [vmem:[%s2163 + $0x298] sm:$0xf] %vm2167, %v2150
        %2226 = vst.msk [vmem:[%s2163 + $0x2a0] sm:$0xff] %vm2164, %v2119
        %2227 = vst.msk [vmem:[%s2163 + $0x2a8] sm:$0xff] %vm2164, %v1916
        %2228 = vst.msk [vmem:[%s2163 + $0x2b0] sm:$0xf] %vm2167, %v2151
        %2229 = vst.msk [vmem:[%s2163 + $0x2b8] sm:$0xff] %vm2164, %v2120
        %2230 = vst.msk [vmem:[%s2163 + $0x2c0] sm:$0xff] %vm2164, %v1918
        %2231 = vst.msk [vmem:[%s2163 + $0x2c8] sm:$0xf] %vm2167, %v2152
        %2232 = vst.msk [vmem:[%s2163 + $0x2d0] sm:$0xff] %vm2164, %v2121
        %2233 = vst.msk [vmem:[%s2163 + $0x2d8] sm:$0xff] %vm2164, %v1920
        %2234 = vst.msk [vmem:[%s2163 + $0x2e0] sm:$0xf] %vm2167, %v2153
        %2235 = vst.msk [vmem:[%s2163 + $0x2e8] sm:$0xff] %vm2164, %v2122
        %2236 = vst.msk [vmem:[%s2163 + $0x2f0] sm:$0xff] %vm2164, %v1922
        %2237 = vst.msk [vmem:[%s2163 + $0x2f8] sm:$0xf] %vm2167, %v2154
        %2238 = vst.msk [vmem:[%s2163 + $0x360] sm:$0xff] %vm2164, %v2123
        %2239 = vst.msk [vmem:[%s2163 + $0x368] sm:$0xff] %vm2164, %v1924
        %2240 = vst.msk [vmem:[%s2163 + $0x370] sm:$0xf] %vm2167, %v2155
        %2241 = vst.msk [vmem:[%s2163 + $0x378] sm:$0xff] %vm2164, %v2124
        %2242 = vst.msk [vmem:[%s2163 + $0x380] sm:$0xff] %vm2164, %v1926
        %2243 = vst.msk [vmem:[%s2163 + $0x388] sm:$0xf] %vm2167, %v2156
        %2244 = vst.msk [vmem:[%s2163 + $0x390] sm:$0xff] %vm2164, %v2125
        %2245 = vst.msk [vmem:[%s2163 + $0x398] sm:$0xff] %vm2164, %v1928
        %2246 = vst.msk [vmem:[%s2163 + $0x3a0] sm:$0xf] %vm2167, %v2157
        %2247 = vst.msk [vmem:[%s2163 + $0x3a8] sm:$0xff] %vm2164, %v2126
        %2248 = vst.msk [vmem:[%s2163 + $0x3b0] sm:$0xff] %vm2164, %v1930
        %2249 = vst.msk [vmem:[%s2163 + $0x3b8] sm:$0xf] %vm2167, %v2158
        %2250 = vst.msk [vmem:[%s2163 + $0x3c0] sm:$0xff] %vm2164, %v2127
        %2251 = vst.msk [vmem:[%s2163 + $0x3c8] sm:$0xff] %vm2164, %v1932
        %2252 = vst.msk [vmem:[%s2163 + $0x3d0] sm:$0xf] %vm2167, %v2159
        %2253 = vst.msk [vmem:[%s2163 + $0x3d8] sm:$0xff] %vm2164, %v2128
        %2254 = vst.msk [vmem:[%s2163 + $0x3e0] sm:$0xff] %vm2164, %v1934
        %2255 = vst.msk [vmem:[%s2163 + $0x3e8] sm:$0xf] %vm2167, %v2160
        %2256 = vst.msk [vmem:[%s2163 + $0x3f0] sm:$0xff] %vm2164, %v2129
        %2257 = vst.msk [vmem:[%s2163 + $0x3f8] sm:$0xff] %vm2164, %v1936
        %2258 = vst.msk [vmem:[%s2163 + $0x400] sm:$0xf] %vm2167, %v2161
        %2259 = vst.msk [vmem:[%s2163 + $0x408] sm:$0xff] %vm2164, %v2130
        %2260 = vst.msk [vmem:[%s2163 + $0x410] sm:$0xff] %vm2164, %v1938
        %2261 = vst.msk [vmem:[%s2163 + $0x418] sm:$0xf] %vm2167, %v2162
        %2262 = vst.msk [vmem:[%s140] sm:$0xff] %vm2164, %v2101
        %2263 = vst.msk [vmem:[%s140 + $0x8] sm:$0xff] %vm2164, %v1880
        %2264 = vst.msk [vmem:[%s140 + $0x10] sm:$0xf] %vm2167, %v2133
        %2265 = vst.msk [vmem:[%s140 + $0x18] sm:$0xff] %vm2164, %v2100
        %2266 = vst.msk [vmem:[%s140 + $0x20] sm:$0xff] %vm2164, %v1878
        %2267 = vst.msk [vmem:[%s140 + $0x28] sm:$0xf] %vm2167, %v2132
        %2268 = vst.msk [vmem:[%s140 + $0x120] sm:$0xff] %vm2164, %v2109
        %2269 = vst.msk [vmem:[%s140 + $0x128] sm:$0xff] %vm2164, %v1896
        %2270 = vst.msk [vmem:[%s140 + $0x130] sm:$0xf] %vm2167, %v2141
        %2271 = vst.msk [vmem:[%s140 + $0x138] sm:$0xff] %vm2164, %v2108
        %2272 = vst.msk [vmem:[%s140 + $0x140] sm:$0xff] %vm2164, %v1894
        %2273 = vst.msk [vmem:[%s140 + $0x148] sm:$0xf] %vm2167, %v2140
        %2274 = vst.msk [vmem:[%s140 + $0x240] sm:$0xff] %vm2164, %v2117
        %2275 = vst.msk [vmem:[%s140 + $0x248] sm:$0xff] %vm2164, %v1912
        %2276 = vst.msk [vmem:[%s140 + $0x250] sm:$0xf] %vm2167, %v2149
        %2277 = vst.msk [vmem:[%s140 + $0x258] sm:$0xff] %vm2164, %v2116
        %2278 = vst.msk [vmem:[%s140 + $0x260] sm:$0xff] %vm2164, %v1910
        %2279 = vst.msk [vmem:[%s140 + $0x268] sm:$0xf] %vm2167, %v2148
        %2280 = vst.msk [vmem:[%s140 + $0x360] sm:$0xff] %vm2164, %v2125
        %2281 = vst.msk [vmem:[%s140 + $0x368] sm:$0xff] %vm2164, %v1928
        %2282 = vst.msk [vmem:[%s140 + $0x370] sm:$0xf] %vm2167, %v2157
        %2283 = vst.msk [vmem:[%s140 + $0x378] sm:$0xff] %vm2164, %v2124
        %2284 = vst.msk [vmem:[%s140 + $0x380] sm:$0xff] %vm2164, %v1926
        %2285 = vst.msk [vmem:[%s140 + $0x388] sm:$0xf] %vm2167, %v2156
        %s2286 = scalar_lea.vmem %s140, 240
        %2287 = vst.msk [vmem:[%s2286] sm:$0xff] %vm2164, %v2105
        %2288 = vst.msk [vmem:[%s2286 + $0x8] sm:$0xff] %vm2164, %v1888
        %2289 = vst.msk [vmem:[%s2286 + $0x10] sm:$0xf] %vm2167, %v2137
        %2290 = vst.msk [vmem:[%s2286 + $0x18] sm:$0xff] %vm2164, %v2104
        %2291 = vst.msk [vmem:[%s2286 + $0x20] sm:$0xff] %vm2164, %v1886
        %2292 = vst.msk [vmem:[%s2286 + $0x28] sm:$0xf] %vm2167, %v2136
        %2293 = vst.msk [vmem:[%s2286 + $0x120] sm:$0xff] %vm2164, %v2113
        %2294 = vst.msk [vmem:[%s2286 + $0x128] sm:$0xff] %vm2164, %v1904
        %2295 = vst.msk [vmem:[%s2286 + $0x130] sm:$0xf] %vm2167, %v2145
        %2296 = vst.msk [vmem:[%s2286 + $0x138] sm:$0xff] %vm2164, %v2112
        %2297 = vst.msk [vmem:[%s2286 + $0x140] sm:$0xff] %vm2164, %v1902
        %2298 = vst.msk [vmem:[%s2286 + $0x148] sm:$0xf] %vm2167, %v2144
        %2299 = vst.msk [vmem:[%s2286 + $0x240] sm:$0xff] %vm2164, %v2121
        %2300 = vst.msk [vmem:[%s2286 + $0x248] sm:$0xff] %vm2164, %v1920
        %2301 = vst.msk [vmem:[%s2286 + $0x250] sm:$0xf] %vm2167, %v2153
        %2302 = vst.msk [vmem:[%s2286 + $0x258] sm:$0xff] %vm2164, %v2120
        %2303 = vst.msk [vmem:[%s2286 + $0x260] sm:$0xff] %vm2164, %v1918
        %2304 = vst.msk [vmem:[%s2286 + $0x268] sm:$0xf] %vm2167, %v2152
        %2305 = vst.msk [vmem:[%s2286 + $0x360] sm:$0xff] %vm2164, %v2129
        %2306 = vst.msk [vmem:[%s2286 + $0x368] sm:$0xff] %vm2164, %v1936
        %2307 = vst.msk [vmem:[%s2286 + $0x370] sm:$0xf] %vm2167, %v2161
        %2308 = vst.msk [vmem:[%s2286 + $0x378] sm:$0xff] %vm2164, %v2128
        %2309 = vst.msk [vmem:[%s2286 + $0x380] sm:$0xff] %vm2164, %v1934
        %2310 = vst.msk [vmem:[%s2286 + $0x388] sm:$0xf] %vm2167, %v2160
        %s2311 = smul.u32 4, %s15
        %p2312 = scmp.lt.s32.totalorder %s2311, 7
        %s2313 = scalar_select %p2312, %s2311, 7
        %s2314 = smul.addr %s2313, 36
        %s2315 = smul.addr %s2314, 8
        %s2316 = scalar_lea.vmem %s1, %s2315
        // Predicated region
        $region29: #{tpu_custom_call.1} parent=23 // pred_check
          %p2317 = pneg %p59
        $region30: #{tpu_custom_call.1} parent=23 // pred_check_branch
          %2319 = sbr.rel (%p2317) target = $region32
        $region31: #{tpu_custom_call.1} parent=23 // pred_region
          %s2320 = smul.u32 4, %s15
        $region32: #{tpu_custom_call.1} parent=23 // pred_fallthru
          _
      $region24: #{tpu_custom_call.1} parent=5 // pred_fallthru
        _
      %p2321 = scmp.le.s32.totalorder 2, %s10
      // Predicated region
      $region33: #{tpu_custom_call.1} parent=5 // pred_check
        %p2322 = pneg %p2321
      $region34: #{tpu_custom_call.1} parent=5 // pred_check_branch
        %2324 = sbr.rel (%p2322) target = $region36
      $region35: #{tpu_custom_call.1} parent=5 // pred_region
        %s2325 = ssub.s32 %s10, 2
        // Predicated region
        $region37: #{tpu_custom_call.1} parent=35 // pred_check
          %p2326 = pneg %p65
        $region38: #{tpu_custom_call.1} parent=35 // pred_check_branch
          %2328 = sbr.rel (%p2326) target = $region40
        $region39: #{tpu_custom_call.1} parent=35 // pred_region
          %s2329 = smul.u32 4, %s16
          %p2330 = scmp.lt.s32.totalorder %s2329, 7
          %s2331 = scalar_select %p2330, %s2329, 7
          %s2332 = smul.addr %s2331, 36
          %s2333 = smul.addr %s2332, 8
          %s2334 = scalar_lea.vmem %s1, %s2333
        $region40: #{tpu_custom_call.1} parent=35 // pred_fallthru
          _
      $region36: #{tpu_custom_call.1} parent=5 // pred_fallthru
        _
    $region6: #{tpu_custom_call.1} parent=1 // loop_footer
      %s14 = sadd.s32 1, %s10
    $region7: #{tpu_custom_call.1} parent=1 // loop_footer_branch
      %9 = sbr.rel target = $region3
    $region8: #{tpu_custom_call.1} parent=1 // loop_exit
      _
    %2335 = vsyncpa [#allocation3], 1
    %s2336 = scalar_lea.sflag [#allocation3], 1
    %2337 = vsyncpa %s2336, 1

</llo_original>
